<compile_context>
chip_gen: v6e
topology: v6e:2x2x1
jax: 0.10.0
libtpu: 0.0.40
codegen_flags: <defaults>
</compile_context>

<pallas_src>
import functools

import jax
import jax.numpy as jnp
from jax.experimental import pallas as pl
from jax.experimental.pallas import tpu as pltpu


def thiccatten_kernel(x_ref, wqkv_ref, bqkv_ref, wfc_ref, bfc_ref, o_ref, *,
                      k, heads, b_blk, t, compute_dtype, approx_recip):
    m = b_blk * t
    hk = heads * k

    # (b_blk, t, k) -> (m, k): leading-dim merge, no lane relayout.
    x2d = x_ref[...].reshape(m, k).astype(compute_dtype)

    # Single fused QKV projection (384-lane-wide result).  The k**-0.5 logits
    # scale is already folded into the Q columns / bias on the host.
    wqkv = wqkv_ref[...].astype(compute_dtype)
    qkv = jnp.dot(x2d, wqkv, preferred_element_type=jnp.float32) + bqkv_ref[...]

    # Split per head with 32-lane-aligned static column slices, then merge the
    # head axis into the batch axis (leading-dim concat, no relayout) so the
    # attention matmuls run as ONE batched einsum over heads*b_blk.
    def split_heads(col0):
        parts = [qkv[:, col0 + h * k: col0 + (h + 1) * k].reshape(b_blk, t, k)
                 for h in range(heads)]
        return jnp.concatenate(parts, axis=0).astype(compute_dtype)  # (heads*b_blk, t, k)

    q3 = split_heads(0)
    k3 = split_heads(hk)
    v3 = split_heads(2 * hk)

    # Thiccatten quirk: keys on the LEFT -> logits[b, i, j] = k_i . q_j and the
    # softmax runs over the *query* axis j (last axis here).
    logits = jnp.einsum('bik,bjk->bij', k3, q3,
                        preferred_element_type=jnp.float32)          # (hb, t, t)

    # Softmax in f32; divide goes to the EUP via pl.reciprocal.
    mx = jnp.max(logits, axis=-1, keepdims=True)
    e = jnp.exp(logits - mx)
    denom = jnp.sum(e, axis=-1, keepdims=True)
    att = e * pl.reciprocal(denom, approx=approx_recip)

    oh = jnp.einsum('bij,bjk->bik', att.astype(compute_dtype), v3,
                    preferred_element_type=jnp.float32)              # (hb, t, k)

    # Re-assemble (m, heads*k) lane-dense (column order h*k + d, matching the
    # torch .view(b, t, h*k)) and run ONE fused fc dot (128-deep contraction)
    # instead of a loop-carried per-head accumulate.
    o2d = jnp.concatenate(
        [oh[h * b_blk:(h + 1) * b_blk].reshape(m, k) for h in range(heads)],
        axis=-1).astype(compute_dtype)                               # (m, hk)

    out = jnp.dot(o2d, wfc_ref[...].astype(compute_dtype),
                  preferred_element_type=jnp.float32) + bfc_ref[...]

    # TODO(synk): present lane-dense (b, t*k) HBM views for x/out (dense vst
    # rows instead of K=32 masked stores) once the (b_blk, t*k) <-> (m, k)
    # in-kernel relayout is verified on the target Mosaic version.
    # TODO(synk): for large T add flash-style (Tq, Tk) tiling + online softmax
    # instead of materializing the (hb, T, T) logits (matters on v7x's 64 MiB VMEM).
    o_ref[...] = out.reshape(b_blk, t, k).astype(o_ref.dtype)


def _estimate_vmem_bytes(b_blk, t, k, heads):
    # Rough f32 upper bound: double-buffered x/out blocks + double-buffered
    # (grid-invariant) weights + per-step intermediates.
    m = b_blk * t
    hk = heads * k
    hb = heads * b_blk
    f32 = 4
    io = 2 * (2 * m * k * f32)
    w = 2 * (k * 3 * hk + 3 * hk + hk * k + k) * f32
    inter = (m * 3 * hk          # qkv
             + 3 * hb * t * k    # q3 / k3 / v3
             + 3 * hb * t * t    # logits / exp / att
             + hb * t * k        # oh
             + 2 * m * hk        # o2d (+ cast copy)
             + 2 * m * k) * f32  # fc out + store staging
    return io + w + inter


def _pick_batch_block(b, t, k, heads, *, target_rows=1024, vmem_budget=40 << 20):
    # Target several hundred MXU rows per grid step (m = b_blk * t), bounded by
    # a VMEM budget that is safe on v7x's smaller VMEM; b_blk must divide b.
    divisors = [d for d in range(1, b + 1) if b % d == 0]
    ok = [d for d in divisors
          if (d * t <= target_rows or d == 1)
          and _estimate_vmem_bytes(d, t, k, heads) <= vmem_budget]
    if not ok:
        ok = [1]
    best = max(ok)
    # v7x has 2 TensorCores: prefer an even-length grid (so the 'parallel'
    # batch axis shards across both TCs) as long as the per-step M dimension
    # stays MXU-saturating.  v5e/v6e are single-TC so this is harmless there.
    if (b // best) % 2 != 0:
        even = [d for d in ok if (b // d) % 2 == 0 and d * t >= 256]
        if even:
            best = max(even)
    return best


def thiccatten(x, params, heads, *, compute_dtype=jnp.bfloat16,
               approx_recip=True, batch_block=None):
    b, t, k = x.shape
    wq, bq, wk, bk, wv, bv, wfc, bfc = params
    hk = heads * k

    # Host prep (all in f32, before any bf16 cast):
    #   * fold the combined k**-0.5 logit scale into the Q weight/bias,
    #   * fuse Q|K|V weights along the output dim -> (k, 3*heads*k) = (32, 384),
    #   * keep fc in its original (heads*k, k) layout for a single fused dot.
    scale = k ** -0.5
    wqkv = jnp.concatenate([wq * scale, wk, wv], axis=1)      # (k, 3*hk)
    bqkv = jnp.concatenate([bq * scale, bk, bv], axis=1)      # (1, 3*hk)

    # MXU operands can be pre-cast on the host (halves weight DMA); biases stay
    # f32 since they're added to f32 accumulators.
    wqkv_c = wqkv.astype(compute_dtype)
    wfc_c = wfc.astype(compute_dtype)

    if batch_block is None:
        batch_block = _pick_batch_block(b, t, k, heads)
    assert b % batch_block == 0, "batch_block must divide batch"
    grid = (b // batch_block,)

    est = _estimate_vmem_bytes(batch_block, t, k, heads)
    vmem_limit = None
    if est > (12 << 20):
        vmem_limit = int(min(64 << 20, 2 * est))   # cap at v7x physical VMEM

    kernel = functools.partial(
        thiccatten_kernel, k=k, heads=heads, b_blk=batch_block, t=t,
        compute_dtype=compute_dtype, approx_recip=approx_recip)

    # NOTE: the weight/bias operands are grid-invariant and tiny (~70 KB total);
    # double-buffering them costs negligible VMEM here, so we skip
    # pipeline_mode=pl.Buffered(1).  Revisit for very large K*heads.
    out = pl.pallas_call(
        kernel,
        out_shape=jax.ShapeDtypeStruct((b, t, k), jnp.float32),
        grid=grid,
        in_specs=[
            pl.BlockSpec((batch_block, t, k), lambda i: (i, 0, 0)),  # x
            pl.BlockSpec((k, 3 * hk), lambda i: (0, 0)),             # fused Wqkv
            pl.BlockSpec((1, 3 * hk), lambda i: (0, 0)),             # fused bqkv
            pl.BlockSpec((hk, k), lambda i: (0, 0)),                 # Wfc
            pl.BlockSpec((1, k), lambda i: (0, 0)),                  # bfc
        ],
        out_specs=pl.BlockSpec((batch_block, t, k), lambda i: (i, 0, 0)),
        compiler_params=pltpu.CompilerParams(
            dimension_semantics=("parallel",),
            vmem_limit_bytes=vmem_limit),
    )(x, wqkv_c, bqkv, wfc_c, bfc)
    return out


def thiccatten_ref(x, params, heads):
    # Pure-JAX reference mirroring the PyTorch forward exactly.
    b, t, k = x.shape
    wq, bq, wk, bk, wv, bv, wfc, bfc = params
    q = (x @ wq + bq[0]).reshape(b, t, heads, k)
    key = (x @ wk + bk[0]).reshape(b, t, heads, k)
    v = (x @ wv + bv[0]).reshape(b, t, heads, k)
    keys = jnp.transpose(key, (0, 2, 1, 3)).reshape(b * heads, t, k) / k ** 0.25
    queries = jnp.transpose(q, (0, 2, 1, 3)).reshape(b * heads, t, k) / k ** 0.25
    values = jnp.transpose(v, (0, 2, 1, 3)).reshape(b * heads, t, k)
    dot = jnp.einsum('bik,bjk->bij', keys, queries)
    att = jax.nn.softmax(dot, axis=2)
    out = jnp.einsum('bij,bjk->bik', att, values).reshape(b, heads, t, k)
    out = jnp.transpose(out, (0, 2, 1, 3)).reshape(b, t, heads * k)
    return out @ wfc + bfc[0]


def init_params(key, k, heads):
    # Deterministic init, PyTorch Linear-style uniform(-1/sqrt(fan_in), 1/sqrt(fan_in)).
    kh = k * heads
    ks = jax.random.split(key, 8)

    def lin(wkey, bkey, fan_in, fan_out):
        bound = 1.0 / (fan_in ** 0.5)
        w = jax.random.uniform(wkey, (fan_in, fan_out), jnp.float32, -bound, bound)
        b = jax.random.uniform(bkey, (1, fan_out), jnp.float32, -bound, bound)
        return w, b

    wq, bq = lin(ks[0], ks[1], k, kh)
    wk, bk = lin(ks[2], ks[3], k, kh)
    wv, bv = lin(ks[4], ks[5], k, kh)
    wfc, bfc = lin(ks[6], ks[7], kh, k)
    return (wq, bq, wk, bk, wv, bv, wfc, bfc)


if __name__ == "__main__":
    B, T, K, HEADS = 2, 8, 32, 4

    root = jax.random.PRNGKey(0)
    pkey, xkey = jax.random.split(root)
    params = init_params(pkey, K, HEADS)
    x = jax.random.normal(xkey, (B, T, K), jnp.float32)

    ref = thiccatten_ref(x, params, HEADS)

    # Strict-numerics path (f32 MXU operands, exact reciprocal): 1e-4 vs reference.
    out_f32 = jax.block_until_ready(
        thiccatten(x, params, HEADS, compute_dtype=jnp.float32, approx_recip=False))
    assert out_f32.shape == (B, T, K)
    assert jnp.allclose(out_f32, ref, atol=1e-4, rtol=1e-4), "f32 mismatch vs reference"

    # Performance path (bf16 MXU operands + approx EUP reciprocal), recommended
    # for v6e/v7x; accumulation stays f32 so error stays at bf16-roundoff level.
    out_bf16 = jax.block_until_ready(thiccatten(x, params, HEADS))
    assert jnp.allclose(out_bf16, ref, atol=5e-2, rtol=5e-2), "bf16 mismatch vs reference"

    print("KERNEL_OK")
</pallas_src>

<mosaic_0001>
module attributes {stable_mosaic.version = 11 : i64} {
  func.func @thiccatten_kernel(%arg0: i32, %arg1: memref<2x8x32xf32, #tpu.memory_space<vmem>>, %arg2: memref<32x384xf32, #tpu.memory_space<vmem>>, %arg3: memref<1x384xf32, #tpu.memory_space<vmem>>, %arg4: memref<128x32xf32, #tpu.memory_space<vmem>>, %arg5: memref<1x32xf32, #tpu.memory_space<vmem>>, %arg6: memref<2x8x32xf32, #tpu.memory_space<vmem>>) attributes {dimension_semantics = [#tpu.dimension_semantics<parallel>], iteration_bounds = array<i64: 1>, scalar_prefetch = 0 : i64, scratch_operands = 0 : i64, tpu.core_type = #tpu.core_type<tc>, window_params = [{transform_indices = @transform_0, window_bounds = array<i64: 2, 8, 32>}, {pipeline_mode = #tpu.pipeline_mode<synchronous>, transform_indices = @transform_1, window_bounds = array<i64: 32, 384>}, {pipeline_mode = #tpu.pipeline_mode<synchronous>, transform_indices = @transform_2, window_bounds = array<i64: 1, 384>}, {pipeline_mode = #tpu.pipeline_mode<synchronous>, transform_indices = @transform_3, window_bounds = array<i64: 128, 32>}, {pipeline_mode = #tpu.pipeline_mode<synchronous>, transform_indices = @transform_4, window_bounds = array<i64: 1, 32>}, {transform_indices = @transform_5, window_bounds = array<i64: 2, 8, 32>}]} {
    %c0 = arith.constant 0 : index
    %c0_0 = arith.constant 0 : index
    %c0_1 = arith.constant 0 : index
    %0 = vector.load %arg1[%c0, %c0_0, %c0_1] : memref<2x8x32xf32, #tpu.memory_space<vmem>>, vector<2x8x32xf32>
    %1 = vector.shape_cast %0 : vector<2x8x32xf32> to vector<16x32xf32>
    %c0_2 = arith.constant 0 : index
    %c0_3 = arith.constant 0 : index
    %2 = vector.load %arg2[%c0_2, %c0_3] : memref<32x384xf32, #tpu.memory_space<vmem>>, vector<32x384xf32>
    %cst = arith.constant dense<0.000000e+00> : vector<16x384xf32>
    %3 = tpu.matmul %1, %2, %cst {dimension_numbers = #tpu.dot_dimension_numbers<[1], [0], [0], [1], [0, 0, 1, 1], [], []>} : vector<16x32xf32>, vector<32x384xf32>, vector<16x384xf32> -> vector<16x384xf32>
    %c0_4 = arith.constant 0 : index
    %c0_5 = arith.constant 0 : index
    %4 = vector.load %arg3[%c0_4, %c0_5] : memref<1x384xf32, #tpu.memory_space<vmem>>, vector<1x384xf32>
    %5 = vector.broadcast %4 : vector<1x384xf32> to vector<16x384xf32>
    %6 = arith.addf %3, %5 : vector<16x384xf32>
    %7 = vector.extract_strided_slice %6 {offsets = [0, 0], sizes = [16, 32], strides = [1, 1]} : vector<16x384xf32> to vector<16x32xf32>
    %8 = vector.shape_cast %7 : vector<16x32xf32> to vector<2x8x32xf32>
    %9 = vector.extract_strided_slice %6 {offsets = [0, 32], sizes = [16, 32], strides = [1, 1]} : vector<16x384xf32> to vector<16x32xf32>
    %10 = vector.shape_cast %9 : vector<16x32xf32> to vector<2x8x32xf32>
    %11 = vector.extract_strided_slice %6 {offsets = [0, 64], sizes = [16, 32], strides = [1, 1]} : vector<16x384xf32> to vector<16x32xf32>
    %12 = vector.shape_cast %11 : vector<16x32xf32> to vector<2x8x32xf32>
    %13 = vector.extract_strided_slice %6 {offsets = [0, 96], sizes = [16, 32], strides = [1, 1]} : vector<16x384xf32> to vector<16x32xf32>
    %14 = vector.shape_cast %13 : vector<16x32xf32> to vector<2x8x32xf32>
    %15 = tpu.concatenate %8, %10, %12, %14 in 0 : vector<2x8x32xf32>, vector<2x8x32xf32>, vector<2x8x32xf32>, vector<2x8x32xf32> -> vector<8x8x32xf32>
    %16 = vector.extract_strided_slice %6 {offsets = [0, 128], sizes = [16, 32], strides = [1, 1]} : vector<16x384xf32> to vector<16x32xf32>
    %17 = vector.shape_cast %16 : vector<16x32xf32> to vector<2x8x32xf32>
    %18 = vector.extract_strided_slice %6 {offsets = [0, 160], sizes = [16, 32], strides = [1, 1]} : vector<16x384xf32> to vector<16x32xf32>
    %19 = vector.shape_cast %18 : vector<16x32xf32> to vector<2x8x32xf32>
    %20 = vector.extract_strided_slice %6 {offsets = [0, 192], sizes = [16, 32], strides = [1, 1]} : vector<16x384xf32> to vector<16x32xf32>
    %21 = vector.shape_cast %20 : vector<16x32xf32> to vector<2x8x32xf32>
    %22 = vector.extract_strided_slice %6 {offsets = [0, 224], sizes = [16, 32], strides = [1, 1]} : vector<16x384xf32> to vector<16x32xf32>
    %23 = vector.shape_cast %22 : vector<16x32xf32> to vector<2x8x32xf32>
    %24 = tpu.concatenate %17, %19, %21, %23 in 0 : vector<2x8x32xf32>, vector<2x8x32xf32>, vector<2x8x32xf32>, vector<2x8x32xf32> -> vector<8x8x32xf32>
    %25 = vector.extract_strided_slice %6 {offsets = [0, 256], sizes = [16, 32], strides = [1, 1]} : vector<16x384xf32> to vector<16x32xf32>
    %26 = vector.shape_cast %25 : vector<16x32xf32> to vector<2x8x32xf32>
    %27 = vector.extract_strided_slice %6 {offsets = [0, 288], sizes = [16, 32], strides = [1, 1]} : vector<16x384xf32> to vector<16x32xf32>
    %28 = vector.shape_cast %27 : vector<16x32xf32> to vector<2x8x32xf32>
    %29 = vector.extract_strided_slice %6 {offsets = [0, 320], sizes = [16, 32], strides = [1, 1]} : vector<16x384xf32> to vector<16x32xf32>
    %30 = vector.shape_cast %29 : vector<16x32xf32> to vector<2x8x32xf32>
    %31 = vector.extract_strided_slice %6 {offsets = [0, 352], sizes = [16, 32], strides = [1, 1]} : vector<16x384xf32> to vector<16x32xf32>
    %32 = vector.shape_cast %31 : vector<16x32xf32> to vector<2x8x32xf32>
    %33 = tpu.concatenate %26, %28, %30, %32 in 0 : vector<2x8x32xf32>, vector<2x8x32xf32>, vector<2x8x32xf32>, vector<2x8x32xf32> -> vector<8x8x32xf32>
    "tpu.trace_start"() <{level = 10 : i32, message = "bik,bjk->bij"}> : () -> ()
    %cst_6 = arith.constant dense<0.000000e+00> : vector<8x8x8xf32>
    %34 = tpu.matmul %24, %15, %cst_6 {dimension_numbers = #tpu.dot_dimension_numbers<[2], [2], [1], [1], [0, 0, 0, 1, 1, 1], [0], [0]>} : vector<8x8x32xf32>, vector<8x8x32xf32>, vector<8x8x8xf32> -> vector<8x8x8xf32>
    "tpu.trace_stop"() : () -> ()
    %cst_7 = arith.constant dense<0xFF800000> : vector<8x8xf32>
    %35 = vector.multi_reduction <maximumf>, %34, %cst_7 [2] : vector<8x8x8xf32> to vector<8x8xf32>
    %36 = vector.shape_cast %35 : vector<8x8xf32> to vector<8x8x1xf32>
    %37 = vector.broadcast %36 : vector<8x8x1xf32> to vector<8x8x8xf32>
    %38 = arith.subf %34, %37 : vector<8x8x8xf32>
    %39 = math.exp %38 : vector<8x8x8xf32>
    %cst_8 = arith.constant dense<0.000000e+00> : vector<8x8xf32>
    %40 = vector.multi_reduction <add>, %39, %cst_8 [2] : vector<8x8x8xf32> to vector<8x8xf32>
    %41 = vector.shape_cast %40 : vector<8x8xf32> to vector<8x8x1xf32>
    %42 = tpu.reciprocal %41 : vector<8x8x1xf32> -> vector<8x8x1xf32>
    %43 = vector.broadcast %42 : vector<8x8x1xf32> to vector<8x8x8xf32>
    %44 = arith.mulf %39, %43 : vector<8x8x8xf32>
    "tpu.trace_start"() <{level = 10 : i32, message = "bij,bjk->bik"}> : () -> ()
    %cst_9 = arith.constant dense<0.000000e+00> : vector<8x8x32xf32>
    %45 = tpu.matmul %44, %33, %cst_9 {dimension_numbers = #tpu.dot_dimension_numbers<[2], [1], [1], [2], [0, 0, 0, 1, 1, 2], [0], [0]>} : vector<8x8x8xf32>, vector<8x8x32xf32>, vector<8x8x32xf32> -> vector<8x8x32xf32>
    "tpu.trace_stop"() : () -> ()
    %46 = vector.extract_strided_slice %45 {offsets = [0, 0, 0], sizes = [2, 8, 32], strides = [1, 1, 1]} : vector<8x8x32xf32> to vector<2x8x32xf32>
    %47 = vector.shape_cast %46 : vector<2x8x32xf32> to vector<16x32xf32>
    %48 = vector.extract_strided_slice %45 {offsets = [2, 0, 0], sizes = [2, 8, 32], strides = [1, 1, 1]} : vector<8x8x32xf32> to vector<2x8x32xf32>
    %49 = vector.shape_cast %48 : vector<2x8x32xf32> to vector<16x32xf32>
    %50 = vector.extract_strided_slice %45 {offsets = [4, 0, 0], sizes = [2, 8, 32], strides = [1, 1, 1]} : vector<8x8x32xf32> to vector<2x8x32xf32>
    %51 = vector.shape_cast %50 : vector<2x8x32xf32> to vector<16x32xf32>
    %52 = vector.extract_strided_slice %45 {offsets = [6, 0, 0], sizes = [2, 8, 32], strides = [1, 1, 1]} : vector<8x8x32xf32> to vector<2x8x32xf32>
    %53 = vector.shape_cast %52 : vector<2x8x32xf32> to vector<16x32xf32>
    %54 = tpu.concatenate %47, %49, %51, %53 in 1 : vector<16x32xf32>, vector<16x32xf32>, vector<16x32xf32>, vector<16x32xf32> -> vector<16x128xf32>
    %c0_10 = arith.constant 0 : index
    %c0_11 = arith.constant 0 : index
    %55 = vector.load %arg4[%c0_10, %c0_11] : memref<128x32xf32, #tpu.memory_space<vmem>>, vector<128x32xf32>
    %cst_12 = arith.constant dense<0.000000e+00> : vector<16x32xf32>
    %56 = tpu.matmul %54, %55, %cst_12 {dimension_numbers = #tpu.dot_dimension_numbers<[1], [0], [0], [1], [0, 0, 1, 1], [], []>} : vector<16x128xf32>, vector<128x32xf32>, vector<16x32xf32> -> vector<16x32xf32>
    %c0_13 = arith.constant 0 : index
    %c0_14 = arith.constant 0 : index
    %57 = vector.load %arg5[%c0_13, %c0_14] : memref<1x32xf32, #tpu.memory_space<vmem>>, vector<1x32xf32>
    %58 = vector.broadcast %57 : vector<1x32xf32> to vector<16x32xf32>
    %59 = arith.addf %56, %58 : vector<16x32xf32>
    %60 = vector.shape_cast %59 : vector<16x32xf32> to vector<2x8x32xf32>
    %c0_15 = arith.constant 0 : index
    %c0_16 = arith.constant 0 : index
    %c0_17 = arith.constant 0 : index
    %61 = vector.load %arg6[%c0_15, %c0_16, %c0_17] : memref<2x8x32xf32, #tpu.memory_space<vmem>>, vector<2x8x32xf32>
    tpu.vector_store %arg6[%c0_15, %c0_16, %c0_17], %60 {strides = array<i32>} : memref<2x8x32xf32, #tpu.memory_space<vmem>>, vector<2x8x32xf32>,
    return
  }
  func.func @transform_0(%arg0: i32) -> (i32, i32, i32) {
    %c0_i32 = arith.constant 0 : i32
    %c0_i32_0 = arith.constant 0 : i32
    %c0_i32_1 = arith.constant 0 : i32
    return %arg0, %c0_i32, %c0_i32_0 : i32, i32, i32
  }
  func.func @transform_1(%arg0: i32) -> (i32, i32) {
    %c0_i32 = arith.constant 0 : i32
    %c0_i32_0 = arith.constant 0 : i32
    %c0_i32_1 = arith.constant 0 : i32
    return %c0_i32, %c0_i32_0 : i32, i32
  }
  func.func @transform_2(%arg0: i32) -> (i32, i32) {
    %c0_i32 = arith.constant 0 : i32
    %c0_i32_0 = arith.constant 0 : i32
    %c0_i32_1 = arith.constant 0 : i32
    return %c0_i32, %c0_i32_0 : i32, i32
  }
  func.func @transform_3(%arg0: i32) -> (i32, i32) {
    %c0_i32 = arith.constant 0 : i32
    %c0_i32_0 = arith.constant 0 : i32
    %c0_i32_1 = arith.constant 0 : i32
    return %c0_i32, %c0_i32_0 : i32, i32
  }
  func.func @transform_4(%arg0: i32) -> (i32, i32) {
    %c0_i32 = arith.constant 0 : i32
    %c0_i32_0 = arith.constant 0 : i32
    %c0_i32_1 = arith.constant 0 : i32
    return %c0_i32, %c0_i32_0 : i32, i32
  }
  func.func @transform_5(%arg0: i32) -> (i32, i32, i32) {
    %c0_i32 = arith.constant 0 : i32
    %c0_i32_0 = arith.constant 0 : i32
    %c0_i32_1 = arith.constant 0 : i32
    return %arg0, %c0_i32, %c0_i32_0 : i32, i32, i32
  }
}

</mosaic_0001>

<llo_original>
// kernel: tpu_custom_call.1
$region0: #{tpu_custom_call.1}
  #allocation0 [shape = 'u32[]', space=smem, size = 0x4, offset = 0x4, fixed_abs, tag = 'smem constant byte address 0x4 - core index']
  #allocation1 [shape = 'u32[144,128]{1,0:T(1,128)}', space=vmem, size = 0x12000, scoped, tag = 'internal scratch']
  %s0 = inlined_call_operand.vmem [shape: f32[2,8,32], index: 0, kind: input, shape index: {}]
  %s1 = inlined_call_operand.vmem [shape: f32[32,384], index: 1, kind: input, shape index: {}]
  %s2 = inlined_call_operand.vmem [shape: f32[1,384], index: 2, kind: input, shape index: {}]
  %s3 = inlined_call_operand.vmem [shape: f32[128,32], index: 3, kind: input, shape index: {}]
  %s4 = inlined_call_operand.vmem [shape: f32[1,32], index: 4, kind: input, shape index: {}]
  %s5 = inlined_call_operand.hbm [shape: f32[2,8,32], index: 5, kind: output, shape index: {}]
  %s6 = sld [smem:[#allocation0]]
  $region30: #{tpu_custom_call.1} parent=0
    _
  %s8 = ssub.s32 1, %s6
  %s9 = scalar_select 0, %s8, %s6
  $region1: #{tpu_custom_call.1} parent=0
    #allocation2 [shape = 'u8[8192]{0}', space=vmem, size = 0x2000, scoped, tag = 'output window, operand 0, single buffered']
    #allocation3 [shape = 's32[1]{0}', space=sflag, size = 0x4, scoped, tag = 'scoped memory for tpu_custom_call.1']
    %10 = vsyncpa [#allocation3], 0
    // Predicated region
    $region2: #{tpu_custom_call.1} parent=1 // pred_check
      _
    $region3: #{tpu_custom_call.1} parent=1 // pred_check_branch
      %12 = sbr.rel (0) target = $region5
    $region4: #{tpu_custom_call.1} parent=1 // pred_region
      _
    $region5: #{tpu_custom_call.1} parent=1 // pred_fallthru
      _
    // Predicated region
    $region6: #{tpu_custom_call.1} parent=1 // pred_check
      _
    $region7: #{tpu_custom_call.1} parent=1 // pred_check_branch
      %14 = sbr.rel (0) target = $region9
    $region8: #{tpu_custom_call.1} parent=1 // pred_region
      _
    $region9: #{tpu_custom_call.1} parent=1 // pred_fallthru
      _
    // Predicated region
    $region10: #{tpu_custom_call.1} parent=1 // pred_check
      _
    $region11: #{tpu_custom_call.1} parent=1 // pred_check_branch
      %16 = sbr.rel (0) target = $region13
    $region12: #{tpu_custom_call.1} parent=1 // pred_region
      _
    $region13: #{tpu_custom_call.1} parent=1 // pred_fallthru
      _
    // Predicated region
    $region14: #{tpu_custom_call.1} parent=1 // pred_check
      _
    $region15: #{tpu_custom_call.1} parent=1 // pred_check_branch
      %18 = sbr.rel (0) target = $region17
    $region16: #{tpu_custom_call.1} parent=1 // pred_region
      _
    $region17: #{tpu_custom_call.1} parent=1 // pred_fallthru
      _
    // Predicated region
    $region18: #{tpu_custom_call.1} parent=1 // pred_check
      _
    $region19: #{tpu_custom_call.1} parent=1 // pred_check_branch
      %20 = sbr.rel (0) target = $region21
    $region20: #{tpu_custom_call.1} parent=1 // pred_region
      _
    $region21: #{tpu_custom_call.1} parent=1 // pred_fallthru
      _
    %v21 = vld [vmem:[%s0] sm:$0xff]
    %v22 = vld [vmem:[%s0 + $0x8] sm:$0xff]
    %v23 = vld [vmem:[%s1] sm:$0xff]
    %v24 = vld [vmem:[%s1 + $0x8] sm:$0xff]
    %v25 = vld [vmem:[%s1 + $0x10] sm:$0xff]
    %v26 = vld [vmem:[%s1 + $0x18] sm:$0xff]
    %v27 = vld [vmem:[%s1 + $0x20] sm:$0xff]
    %v28 = vld [vmem:[%s1 + $0x28] sm:$0xff]
    %v29 = vld [vmem:[%s1 + $0x30] sm:$0xff]
    %v30 = vld [vmem:[%s1 + $0x38] sm:$0xff]
    %v31 = vld [vmem:[%s1 + $0x40] sm:$0xff]
    %v32 = vld [vmem:[%s1 + $0x48] sm:$0xff]
    %v33 = vld [vmem:[%s1 + $0x50] sm:$0xff]
    %v34 = vld [vmem:[%s1 + $0x58] sm:$0xff]
    %v35 = vld [vmem:[%s2] sm:$0x7]
    %v37 = vlaneseq
    %v38 = vshrl.u32 %v37, 7
    %v39 = vsub.s32 0, %v38
    %v40 = vrot.slane %v35, %v39
    %v41 = vlaneseq
    %v42 = vshrl.u32 %v41, 7
    %v43 = vsub.s32 1, %v42
    %v44 = vrot.slane %v35, %v43
    %v45 = vlaneseq
    %v46 = vshrl.u32 %v45, 7
    %v47 = vsub.s32 2, %v46
    %v48 = vrot.slane %v35, %v47
    %vm52 = vcmask 261120
    %v54 = vsel %vm52, %v21, 0
    %v57 = vsel %vm52, %v22, 0
    %59 = vmatprep.subr.mxu0 0.0
    %60 = vmatpush1.msra.mxu0 0.0
    %61 = vmatprep.subr.mxu0 0.0
    %62 = vmatpush1.msra.mxu0 0.0
    %63 = vmatprep.subr.mxu0 0.0
    %64 = vmatpush1.msra.mxu0 0.0
    %65 = vmatprep.subr.mxu0 0.0
    %66 = vmatpush1.msra.mxu0 0.0
    %67 = vmatprep.subr.mxu0 0.0
    %68 = vmatpush1.msra.mxu0 0.0
    %69 = vmatprep.subr.mxu0 0.0
    %70 = vmatpush1.msra.mxu0 0.0
    %71 = vmatprep.subr.mxu0 0.0
    %72 = vmatpush1.msra.mxu0 0.0
    %73 = vmatprep.subr.mxu0 0.0
    %74 = vmatpush1.msra.mxu0 0.0
    %75 = vmatprep.subr.mxu0 0.0
    %76 = vmatpush1.msra.mxu0 0.0
    %77 = vmatprep.subr.mxu0 0.0
    %78 = vmatpush1.msra.mxu0 0.0
    %79 = vmatprep.subr.mxu0 0.0
    %80 = vmatpush1.msra.mxu0 0.0
    %81 = vmatprep.subr.mxu0 0.0
    %82 = vmatpush1.msra.mxu0 0.0
    %83 = vmatprep.subr.mxu0 %v33
    %84 = vmatpush1.msra.mxu0 %v32
    %85 = vmatprep.subr.mxu0 %v30
    %86 = vmatpush1.msra.mxu0 %v29
    %87 = vmatprep.subr.mxu0 %v27
    %88 = vmatpush1.msra.mxu0 %v26
    %89 = vmatprep.subr.mxu0 %v24
    %90 = vmatpush1.msra.mxu0 %v23
    %91 = vmatprep.subr.mxu0 0.0
    %92 = vmatpush2.msra.mxu0 0.0
    %93 = vmatprep.subr.mxu0 0.0
    %94 = vmatpush2.msra.mxu0 0.0
    %95 = vmatprep.subr.mxu0 0.0
    %96 = vmatpush2.msra.mxu0 0.0
    %97 = vmatprep.subr.mxu0 0.0
    %98 = vmatpush2.msra.mxu0 0.0
    %99 = vmatprep.subr.mxu0 0.0
    %100 = vmatpush2.msra.mxu0 0.0
    %101 = vmatprep.subr.mxu0 0.0
    %102 = vmatpush2.msra.mxu0 0.0
    %103 = vmatprep.subr.mxu0 0.0
    %104 = vmatpush2.msra.mxu0 0.0
    %105 = vmatprep.subr.mxu0 0.0
    %106 = vmatpush2.msra.mxu0 0.0
    %107 = vmatprep.subr.mxu0 0.0
    %108 = vmatpush2.msra.mxu0 0.0
    %109 = vmatprep.subr.mxu0 0.0
    %110 = vmatpush2.msra.mxu0 0.0
    %111 = vmatprep.subr.mxu0 0.0
    %112 = vmatpush2.msra.mxu0 0.0
    %113 = vmatprep.subr.mxu0 0.0
    %114 = vmatpush2.msra.mxu0 0.0
    %115 = vmatprep.subr.mxu0 0.0
    %116 = vmatpush2.msra.mxu0 0.0
    %117 = vmatprep.subr.mxu0 0.0
    %118 = vmatpush2.msra.mxu0 0.0
    %119 = vmatprep.subr.mxu0 0.0
    %120 = vmatpush2.msra.mxu0 0.0
    %121 = vmatprep.subr.mxu0 0.0
    %122 = vmatpush2.msra.mxu0 0.0
    %123 = vmatprep.mubr.f32.mxu0 0.0
    %124 = vmatmul.mubr.f32.gmra.mxu0 %v54
    %v125 = vpop.f32.mrf.mxu0
    %v126 = vadd.f32 %v40, %v125
    %v127 = vpop.f32.mrf.mxu0
    %v128 = vadd.f32 %v44, %v127
    %129 = vmatprep.mubr.f32.mxu0 0.0
    %130 = vmatmul.mubr.f32.gmra.mxu0 %v57
    %v131 = vpop.f32.mrf.mxu0
    %v132 = vadd.f32 %v40, %v131
    %v133 = vpop.f32.mrf.mxu0
    %v134 = vadd.f32 %v44, %v133
    %135 = vdwg.mxu0
    %136 = vmatprep.subr.mxu0 0.0
    %137 = vmatpush1.msra.mxu0 0.0
    %138 = vmatprep.subr.mxu0 0.0
    %139 = vmatpush1.msra.mxu0 0.0
    %140 = vmatprep.subr.mxu0 0.0
    %141 = vmatpush1.msra.mxu0 0.0
    %142 = vmatprep.subr.mxu0 0.0
    %143 = vmatpush1.msra.mxu0 0.0
    %144 = vmatprep.subr.mxu0 0.0
    %145 = vmatpush1.msra.mxu0 0.0
    %146 = vmatprep.subr.mxu0 0.0
    %147 = vmatpush1.msra.mxu0 0.0
    %148 = vmatprep.subr.mxu0 0.0
    %149 = vmatpush1.msra.mxu0 0.0
    %150 = vmatprep.subr.mxu0 0.0
    %151 = vmatpush1.msra.mxu0 0.0
    %152 = vmatprep.subr.mxu0 0.0
    %153 = vmatpush1.msra.mxu0 0.0
    %154 = vmatprep.subr.mxu0 0.0
    %155 = vmatpush1.msra.mxu0 0.0
    %156 = vmatprep.subr.mxu0 0.0
    %157 = vmatpush1.msra.mxu0 0.0
    %158 = vmatprep.subr.mxu0 0.0
    %159 = vmatpush1.msra.mxu0 0.0
    %160 = vmatprep.subr.mxu0 0.0
    %161 = vmatpush1.msra.mxu0 %v34
    %162 = vmatprep.subr.mxu0 0.0
    %163 = vmatpush1.msra.mxu0 %v31
    %164 = vmatprep.subr.mxu0 0.0
    %165 = vmatpush1.msra.mxu0 %v28
    %166 = vmatprep.subr.mxu0 0.0
    %167 = vmatpush1.msra.mxu0 %v25
    %168 = vmatprep.subr.mxu0 0.0
    %169 = vmatpush2.msra.mxu0 0.0
    %170 = vmatprep.subr.mxu0 0.0
    %171 = vmatpush2.msra.mxu0 0.0
    %172 = vmatprep.subr.mxu0 0.0
    %173 = vmatpush2.msra.mxu0 0.0
    %174 = vmatprep.subr.mxu0 0.0
    %175 = vmatpush2.msra.mxu0 0.0
    %176 = vmatprep.subr.mxu0 0.0
    %177 = vmatpush2.msra.mxu0 0.0
    %178 = vmatprep.subr.mxu0 0.0
    %179 = vmatpush2.msra.mxu0 0.0
    %180 = vmatprep.subr.mxu0 0.0
    %181 = vmatpush2.msra.mxu0 0.0
    %182 = vmatprep.subr.mxu0 0.0
    %183 = vmatpush2.msra.mxu0 0.0
    %184 = vmatprep.subr.mxu0 0.0
    %185 = vmatpush2.msra.mxu0 0.0
    %186 = vmatprep.subr.mxu0 0.0
    %187 = vmatpush2.msra.mxu0 0.0
    %188 = vmatprep.subr.mxu0 0.0
    %189 = vmatpush2.msra.mxu0 0.0
    %190 = vmatprep.subr.mxu0 0.0
    %191 = vmatpush2.msra.mxu0 0.0
    %192 = vmatprep.subr.mxu0 0.0
    %193 = vmatpush2.msra.mxu0 0.0
    %194 = vmatprep.subr.mxu0 0.0
    %195 = vmatpush2.msra.mxu0 0.0
    %196 = vmatprep.subr.mxu0 0.0
    %197 = vmatpush2.msra.mxu0 0.0
    %198 = vmatprep.subr.mxu0 0.0
    %199 = vmatpush2.msra.mxu0 0.0
    %200 = vmatprep.mubr.f32.mxu0 0.0
    %201 = vmatmul.mubr.f32.gmra.mxu0 %v54
    %v202 = vpop.f32.mrf.mxu0
    %v203 = vadd.f32 %v48, %v202
    %v204 = vpop.f32.mrf.mxu0
    %205 = vmatprep.mubr.f32.mxu0 0.0
    %206 = vmatmul.mubr.f32.gmra.mxu0 %v57
    %v207 = vpop.f32.mrf.mxu0
    %v208 = vadd.f32 %v48, %v207
    %v209 = vpop.f32.mrf.mxu0
    %210 = vdwg.mxu0
    %213 = vrot.lane.b32.xlu0 %v126, 96
    %v214 = vpop.permute.xlu0 %213
    %215 = vrot.lane.b32.xlu0 %v132, 96
    %v216 = vpop.permute.xlu0 %215
    %217 = vrot.lane.b32.xlu0 %v126, 64
    %v218 = vpop.permute.xlu0 %217
    %219 = vrot.lane.b32.xlu0 %v132, 64
    %v220 = vpop.permute.xlu0 %219
    %221 = vrot.lane.b32.xlu0 %v126, 32
    %v222 = vpop.permute.xlu0 %221
    %223 = vrot.lane.b32.xlu0 %v132, 32
    %v224 = vpop.permute.xlu0 %223
    %227 = vrot.lane.b32.xlu0 %v128, 96
    %v228 = vpop.permute.xlu0 %227
    %229 = vrot.lane.b32.xlu0 %v134, 96
    %v230 = vpop.permute.xlu0 %229
    %231 = vrot.lane.b32.xlu0 %v128, 64
    %v232 = vpop.permute.xlu0 %231
    %233 = vrot.lane.b32.xlu0 %v134, 64
    %v234 = vpop.permute.xlu0 %233
    %235 = vrot.lane.b32.xlu0 %v128, 32
    %v236 = vpop.permute.xlu0 %235
    %237 = vrot.lane.b32.xlu0 %v134, 32
    %v238 = vpop.permute.xlu0 %237
    %241 = vrot.lane.b32.xlu0 %v203, 96
    %v242 = vpop.permute.xlu0 %241
    %243 = vrot.lane.b32.xlu0 %v208, 96
    %v244 = vpop.permute.xlu0 %243
    %247 = vrot.lane.b32.xlu0 %v203, 64
    %v248 = vpop.permute.xlu0 %247
    %249 = vrot.lane.b32.xlu0 %v208, 64
    %v250 = vpop.permute.xlu0 %249
    %253 = vrot.lane.b32.xlu0 %v203, 32
    %v254 = vpop.permute.xlu0 %253
    %255 = vrot.lane.b32.xlu0 %v208, 32
    %v256 = vpop.permute.xlu0 %255
    %v259 = vsel %vm52, %v128, 0
    %v261 = vsel %vm52, %v126, 0
    %263 = vmatprep.subr.mxu0 0.0
    %264 = vmatpush1.xpose.msra.mxu0 0.0
    %265 = vmatprep.subr.mxu0 0.0
    %266 = vmatpush1.xpose.msra.mxu0 0.0
    %267 = vmatprep.subr.mxu0 0.0
    %268 = vmatpush1.xpose.msra.mxu0 0.0
    %269 = vmatprep.subr.mxu0 0.0
    %270 = vmatpush1.xpose.msra.mxu0 0.0
    %271 = vmatprep.subr.mxu0 0.0
    %272 = vmatpush1.xpose.msra.mxu0 0.0
    %273 = vmatprep.subr.mxu0 0.0
    %274 = vmatpush1.xpose.msra.mxu0 0.0
    %275 = vmatprep.subr.mxu0 0.0
    %276 = vmatpush1.xpose.msra.mxu0 0.0
    %277 = vmatprep.subr.mxu0 0.0
    %278 = vmatpush1.xpose.msra.mxu0 0.0
    %279 = vmatprep.subr.mxu0 0.0
    %280 = vmatpush1.xpose.msra.mxu0 0.0
    %281 = vmatprep.subr.mxu0 0.0
    %282 = vmatpush1.xpose.msra.mxu0 0.0
    %283 = vmatprep.subr.mxu0 0.0
    %284 = vmatpush1.xpose.msra.mxu0 0.0
    %285 = vmatprep.subr.mxu0 0.0
    %286 = vmatpush1.xpose.msra.mxu0 0.0
    %287 = vmatprep.subr.mxu0 0.0
    %288 = vmatpush1.xpose.msra.mxu0 0.0
    %289 = vmatprep.subr.mxu0 0.0
    %290 = vmatpush1.xpose.msra.mxu0 0.0
    %291 = vmatprep.subr.mxu0 0.0
    %292 = vmatpush1.xpose.msra.mxu0 0.0
    %293 = vmatprep.subr.mxu0 0.0
    %294 = vmatpush1.xpose.msra.mxu0 %v261
    %295 = vmatprep.subr.mxu0 0.0
    %296 = vmatpush2.xpose.msra.mxu0 0.0
    %297 = vmatprep.subr.mxu0 0.0
    %298 = vmatpush2.xpose.msra.mxu0 0.0
    %299 = vmatprep.subr.mxu0 0.0
    %300 = vmatpush2.xpose.msra.mxu0 0.0
    %301 = vmatprep.subr.mxu0 0.0
    %302 = vmatpush2.xpose.msra.mxu0 0.0
    %303 = vmatprep.subr.mxu0 0.0
    %304 = vmatpush2.xpose.msra.mxu0 0.0
    %305 = vmatprep.subr.mxu0 0.0
    %306 = vmatpush2.xpose.msra.mxu0 0.0
    %307 = vmatprep.subr.mxu0 0.0
    %308 = vmatpush2.xpose.msra.mxu0 0.0
    %309 = vmatprep.subr.mxu0 0.0
    %310 = vmatpush2.xpose.msra.mxu0 0.0
    %311 = vmatprep.subr.mxu0 0.0
    %312 = vmatpush2.xpose.msra.mxu0 0.0
    %313 = vmatprep.subr.mxu0 0.0
    %314 = vmatpush2.xpose.msra.mxu0 0.0
    %315 = vmatprep.subr.mxu0 0.0
    %316 = vmatpush2.xpose.msra.mxu0 0.0
    %317 = vmatprep.subr.mxu0 0.0
    %318 = vmatpush2.xpose.msra.mxu0 0.0
    %319 = vmatprep.subr.mxu0 0.0
    %320 = vmatpush2.xpose.msra.mxu0 0.0
    %321 = vmatprep.subr.mxu0 0.0
    %322 = vmatpush2.xpose.msra.mxu0 0.0
    %323 = vmatprep.subr.mxu0 0.0
    %324 = vmatpush2.xpose.msra.mxu0 0.0
    %325 = vmatprep.subr.mxu0 0.0
    %326 = vmatpush2.xpose.msra.mxu0 0.0
    %327 = vmatprep.mubr.f32.mxu0 0.0
    %328 = vmatmul.mubr.f32.gmra.mxu0 %v259
    %v329 = vpop.f32.mrf.mxu0
    %v330 = vadd.f32 0.0, %v329
    %v331 = vpop.f32.mrf.mxu0
    %332 = vdwg.mxu0
    %v333 = vsel %vm52, %v134, 0
    %v335 = vsel %vm52, %v132, 0
    %337 = vmatprep.subr.mxu0 0.0
    %338 = vmatpush1.xpose.msra.mxu0 0.0
    %339 = vmatprep.subr.mxu0 0.0
    %340 = vmatpush1.xpose.msra.mxu0 0.0
    %341 = vmatprep.subr.mxu0 0.0
    %342 = vmatpush1.xpose.msra.mxu0 0.0
    %343 = vmatprep.subr.mxu0 0.0
    %344 = vmatpush1.xpose.msra.mxu0 0.0
    %345 = vmatprep.subr.mxu0 0.0
    %346 = vmatpush1.xpose.msra.mxu0 0.0
    %347 = vmatprep.subr.mxu0 0.0
    %348 = vmatpush1.xpose.msra.mxu0 0.0
    %349 = vmatprep.subr.mxu0 0.0
    %350 = vmatpush1.xpose.msra.mxu0 0.0
    %351 = vmatprep.subr.mxu0 0.0
    %352 = vmatpush1.xpose.msra.mxu0 0.0
    %353 = vmatprep.subr.mxu0 0.0
    %354 = vmatpush1.xpose.msra.mxu0 0.0
    %355 = vmatprep.subr.mxu0 0.0
    %356 = vmatpush1.xpose.msra.mxu0 0.0
    %357 = vmatprep.subr.mxu0 0.0
    %358 = vmatpush1.xpose.msra.mxu0 0.0
    %359 = vmatprep.subr.mxu0 0.0
    %360 = vmatpush1.xpose.msra.mxu0 0.0
    %361 = vmatprep.subr.mxu0 0.0
    %362 = vmatpush1.xpose.msra.mxu0 0.0
    %363 = vmatprep.subr.mxu0 0.0
    %364 = vmatpush1.xpose.msra.mxu0 0.0
    %365 = vmatprep.subr.mxu0 0.0
    %366 = vmatpush1.xpose.msra.mxu0 0.0
    %367 = vmatprep.subr.mxu0 0.0
    %368 = vmatpush1.xpose.msra.mxu0 %v335
    %369 = vmatprep.subr.mxu0 0.0
    %370 = vmatpush2.xpose.msra.mxu0 0.0
    %371 = vmatprep.subr.mxu0 0.0
    %372 = vmatpush2.xpose.msra.mxu0 0.0
    %373 = vmatprep.subr.mxu0 0.0
    %374 = vmatpush2.xpose.msra.mxu0 0.0
    %375 = vmatprep.subr.mxu0 0.0
    %376 = vmatpush2.xpose.msra.mxu0 0.0
    %377 = vmatprep.subr.mxu0 0.0
    %378 = vmatpush2.xpose.msra.mxu0 0.0
    %379 = vmatprep.subr.mxu0 0.0
    %380 = vmatpush2.xpose.msra.mxu0 0.0
    %381 = vmatprep.subr.mxu0 0.0
    %382 = vmatpush2.xpose.msra.mxu0 0.0
    %383 = vmatprep.subr.mxu0 0.0
    %384 = vmatpush2.xpose.msra.mxu0 0.0
    %385 = vmatprep.subr.mxu0 0.0
    %386 = vmatpush2.xpose.msra.mxu0 0.0
    %387 = vmatprep.subr.mxu0 0.0
    %388 = vmatpush2.xpose.msra.mxu0 0.0
    %389 = vmatprep.subr.mxu0 0.0
    %390 = vmatpush2.xpose.msra.mxu0 0.0
    %391 = vmatprep.subr.mxu0 0.0
    %392 = vmatpush2.xpose.msra.mxu0 0.0
    %393 = vmatprep.subr.mxu0 0.0
    %394 = vmatpush2.xpose.msra.mxu0 0.0
    %395 = vmatprep.subr.mxu0 0.0
    %396 = vmatpush2.xpose.msra.mxu0 0.0
    %397 = vmatprep.subr.mxu0 0.0
    %398 = vmatpush2.xpose.msra.mxu0 0.0
    %399 = vmatprep.subr.mxu0 0.0
    %400 = vmatpush2.xpose.msra.mxu0 0.0
    %401 = vmatprep.mubr.f32.mxu0 0.0
    %402 = vmatmul.mubr.f32.gmra.mxu0 %v333
    %v403 = vpop.f32.mrf.mxu0
    %v404 = vadd.f32 0.0, %v403
    %v405 = vpop.f32.mrf.mxu0
    %406 = vdwg.mxu0
    %v407 = vsel %vm52, %v228, 0
    %v409 = vsel %vm52, %v214, 0
    %411 = vmatprep.subr.mxu0 0.0
    %412 = vmatpush1.xpose.msra.mxu0 0.0
    %413 = vmatprep.subr.mxu0 0.0
    %414 = vmatpush1.xpose.msra.mxu0 0.0
    %415 = vmatprep.subr.mxu0 0.0
    %416 = vmatpush1.xpose.msra.mxu0 0.0
    %417 = vmatprep.subr.mxu0 0.0
    %418 = vmatpush1.xpose.msra.mxu0 0.0
    %419 = vmatprep.subr.mxu0 0.0
    %420 = vmatpush1.xpose.msra.mxu0 0.0
    %421 = vmatprep.subr.mxu0 0.0
    %422 = vmatpush1.xpose.msra.mxu0 0.0
    %423 = vmatprep.subr.mxu0 0.0
    %424 = vmatpush1.xpose.msra.mxu0 0.0
    %425 = vmatprep.subr.mxu0 0.0
    %426 = vmatpush1.xpose.msra.mxu0 0.0
    %427 = vmatprep.subr.mxu0 0.0
    %428 = vmatpush1.xpose.msra.mxu0 0.0
    %429 = vmatprep.subr.mxu0 0.0
    %430 = vmatpush1.xpose.msra.mxu0 0.0
    %431 = vmatprep.subr.mxu0 0.0
    %432 = vmatpush1.xpose.msra.mxu0 0.0
    %433 = vmatprep.subr.mxu0 0.0
    %434 = vmatpush1.xpose.msra.mxu0 0.0
    %435 = vmatprep.subr.mxu0 0.0
    %436 = vmatpush1.xpose.msra.mxu0 0.0
    %437 = vmatprep.subr.mxu0 0.0
    %438 = vmatpush1.xpose.msra.mxu0 0.0
    %439 = vmatprep.subr.mxu0 0.0
    %440 = vmatpush1.xpose.msra.mxu0 0.0
    %441 = vmatprep.subr.mxu0 0.0
    %442 = vmatpush1.xpose.msra.mxu0 %v409
    %443 = vmatprep.subr.mxu0 0.0
    %444 = vmatpush2.xpose.msra.mxu0 0.0
    %445 = vmatprep.subr.mxu0 0.0
    %446 = vmatpush2.xpose.msra.mxu0 0.0
    %447 = vmatprep.subr.mxu0 0.0
    %448 = vmatpush2.xpose.msra.mxu0 0.0
    %449 = vmatprep.subr.mxu0 0.0
    %450 = vmatpush2.xpose.msra.mxu0 0.0
    %451 = vmatprep.subr.mxu0 0.0
    %452 = vmatpush2.xpose.msra.mxu0 0.0
    %453 = vmatprep.subr.mxu0 0.0
    %454 = vmatpush2.xpose.msra.mxu0 0.0
    %455 = vmatprep.subr.mxu0 0.0
    %456 = vmatpush2.xpose.msra.mxu0 0.0
    %457 = vmatprep.subr.mxu0 0.0
    %458 = vmatpush2.xpose.msra.mxu0 0.0
    %459 = vmatprep.subr.mxu0 0.0
    %460 = vmatpush2.xpose.msra.mxu0 0.0
    %461 = vmatprep.subr.mxu0 0.0
    %462 = vmatpush2.xpose.msra.mxu0 0.0
    %463 = vmatprep.subr.mxu0 0.0
    %464 = vmatpush2.xpose.msra.mxu0 0.0
    %465 = vmatprep.subr.mxu0 0.0
    %466 = vmatpush2.xpose.msra.mxu0 0.0
    %467 = vmatprep.subr.mxu0 0.0
    %468 = vmatpush2.xpose.msra.mxu0 0.0
    %469 = vmatprep.subr.mxu0 0.0
    %470 = vmatpush2.xpose.msra.mxu0 0.0
    %471 = vmatprep.subr.mxu0 0.0
    %472 = vmatpush2.xpose.msra.mxu0 0.0
    %473 = vmatprep.subr.mxu0 0.0
    %474 = vmatpush2.xpose.msra.mxu0 0.0
    %475 = vmatprep.mubr.f32.mxu0 0.0
    %476 = vmatmul.mubr.f32.gmra.mxu0 %v407
    %v477 = vpop.f32.mrf.mxu0
    %v478 = vadd.f32 0.0, %v477
    %v479 = vpop.f32.mrf.mxu0
    %480 = vdwg.mxu0
    %v481 = vsel %vm52, %v230, 0
    %v483 = vsel %vm52, %v216, 0
    %485 = vmatprep.subr.mxu0 0.0
    %486 = vmatpush1.xpose.msra.mxu0 0.0
    %487 = vmatprep.subr.mxu0 0.0
    %488 = vmatpush1.xpose.msra.mxu0 0.0
    %489 = vmatprep.subr.mxu0 0.0
    %490 = vmatpush1.xpose.msra.mxu0 0.0
    %491 = vmatprep.subr.mxu0 0.0
    %492 = vmatpush1.xpose.msra.mxu0 0.0
    %493 = vmatprep.subr.mxu0 0.0
    %494 = vmatpush1.xpose.msra.mxu0 0.0
    %495 = vmatprep.subr.mxu0 0.0
    %496 = vmatpush1.xpose.msra.mxu0 0.0
    %497 = vmatprep.subr.mxu0 0.0
    %498 = vmatpush1.xpose.msra.mxu0 0.0
    %499 = vmatprep.subr.mxu0 0.0
    %500 = vmatpush1.xpose.msra.mxu0 0.0
    %501 = vmatprep.subr.mxu0 0.0
    %502 = vmatpush1.xpose.msra.mxu0 0.0
    %503 = vmatprep.subr.mxu0 0.0
    %504 = vmatpush1.xpose.msra.mxu0 0.0
    %505 = vmatprep.subr.mxu0 0.0
    %506 = vmatpush1.xpose.msra.mxu0 0.0
    %507 = vmatprep.subr.mxu0 0.0
    %508 = vmatpush1.xpose.msra.mxu0 0.0
    %509 = vmatprep.subr.mxu0 0.0
    %510 = vmatpush1.xpose.msra.mxu0 0.0
    %511 = vmatprep.subr.mxu0 0.0
    %512 = vmatpush1.xpose.msra.mxu0 0.0
    %513 = vmatprep.subr.mxu0 0.0
    %514 = vmatpush1.xpose.msra.mxu0 0.0
    %515 = vmatprep.subr.mxu0 0.0
    %516 = vmatpush1.xpose.msra.mxu0 %v483
    %517 = vmatprep.subr.mxu0 0.0
    %518 = vmatpush2.xpose.msra.mxu0 0.0
    %519 = vmatprep.subr.mxu0 0.0
    %520 = vmatpush2.xpose.msra.mxu0 0.0
    %521 = vmatprep.subr.mxu0 0.0
    %522 = vmatpush2.xpose.msra.mxu0 0.0
    %523 = vmatprep.subr.mxu0 0.0
    %524 = vmatpush2.xpose.msra.mxu0 0.0
    %525 = vmatprep.subr.mxu0 0.0
    %526 = vmatpush2.xpose.msra.mxu0 0.0
    %527 = vmatprep.subr.mxu0 0.0
    %528 = vmatpush2.xpose.msra.mxu0 0.0
    %529 = vmatprep.subr.mxu0 0.0
    %530 = vmatpush2.xpose.msra.mxu0 0.0
    %531 = vmatprep.subr.mxu0 0.0
    %532 = vmatpush2.xpose.msra.mxu0 0.0
    %533 = vmatprep.subr.mxu0 0.0
    %534 = vmatpush2.xpose.msra.mxu0 0.0
    %535 = vmatprep.subr.mxu0 0.0
    %536 = vmatpush2.xpose.msra.mxu0 0.0
    %537 = vmatprep.subr.mxu0 0.0
    %538 = vmatpush2.xpose.msra.mxu0 0.0
    %539 = vmatprep.subr.mxu0 0.0
    %540 = vmatpush2.xpose.msra.mxu0 0.0
    %541 = vmatprep.subr.mxu0 0.0
    %542 = vmatpush2.xpose.msra.mxu0 0.0
    %543 = vmatprep.subr.mxu0 0.0
    %544 = vmatpush2.xpose.msra.mxu0 0.0
    %545 = vmatprep.subr.mxu0 0.0
    %546 = vmatpush2.xpose.msra.mxu0 0.0
    %547 = vmatprep.subr.mxu0 0.0
    %548 = vmatpush2.xpose.msra.mxu0 0.0
    %549 = vmatprep.mubr.f32.mxu0 0.0
    %550 = vmatmul.mubr.f32.gmra.mxu0 %v481
    %v551 = vpop.f32.mrf.mxu0
    %v552 = vadd.f32 0.0, %v551
    %v553 = vpop.f32.mrf.mxu0
    %554 = vdwg.mxu0
    %v555 = vsel %vm52, %v232, 0
    %v557 = vsel %vm52, %v218, 0
    %559 = vmatprep.subr.mxu0 0.0
    %560 = vmatpush1.xpose.msra.mxu0 0.0
    %561 = vmatprep.subr.mxu0 0.0
    %562 = vmatpush1.xpose.msra.mxu0 0.0
    %563 = vmatprep.subr.mxu0 0.0
    %564 = vmatpush1.xpose.msra.mxu0 0.0
    %565 = vmatprep.subr.mxu0 0.0
    %566 = vmatpush1.xpose.msra.mxu0 0.0
    %567 = vmatprep.subr.mxu0 0.0
    %568 = vmatpush1.xpose.msra.mxu0 0.0
    %569 = vmatprep.subr.mxu0 0.0
    %570 = vmatpush1.xpose.msra.mxu0 0.0
    %571 = vmatprep.subr.mxu0 0.0
    %572 = vmatpush1.xpose.msra.mxu0 0.0
    %573 = vmatprep.subr.mxu0 0.0
    %574 = vmatpush1.xpose.msra.mxu0 0.0
    %575 = vmatprep.subr.mxu0 0.0
    %576 = vmatpush1.xpose.msra.mxu0 0.0
    %577 = vmatprep.subr.mxu0 0.0
    %578 = vmatpush1.xpose.msra.mxu0 0.0
    %579 = vmatprep.subr.mxu0 0.0
    %580 = vmatpush1.xpose.msra.mxu0 0.0
    %581 = vmatprep.subr.mxu0 0.0
    %582 = vmatpush1.xpose.msra.mxu0 0.0
    %583 = vmatprep.subr.mxu0 0.0
    %584 = vmatpush1.xpose.msra.mxu0 0.0
    %585 = vmatprep.subr.mxu0 0.0
    %586 = vmatpush1.xpose.msra.mxu0 0.0
    %587 = vmatprep.subr.mxu0 0.0
    %588 = vmatpush1.xpose.msra.mxu0 0.0
    %589 = vmatprep.subr.mxu0 0.0
    %590 = vmatpush1.xpose.msra.mxu0 %v557
    %591 = vmatprep.subr.mxu0 0.0
    %592 = vmatpush2.xpose.msra.mxu0 0.0
    %593 = vmatprep.subr.mxu0 0.0
    %594 = vmatpush2.xpose.msra.mxu0 0.0
    %595 = vmatprep.subr.mxu0 0.0
    %596 = vmatpush2.xpose.msra.mxu0 0.0
    %597 = vmatprep.subr.mxu0 0.0
    %598 = vmatpush2.xpose.msra.mxu0 0.0
    %599 = vmatprep.subr.mxu0 0.0
    %600 = vmatpush2.xpose.msra.mxu0 0.0
    %601 = vmatprep.subr.mxu0 0.0
    %602 = vmatpush2.xpose.msra.mxu0 0.0
    %603 = vmatprep.subr.mxu0 0.0
    %604 = vmatpush2.xpose.msra.mxu0 0.0
    %605 = vmatprep.subr.mxu0 0.0
    %606 = vmatpush2.xpose.msra.mxu0 0.0
    %607 = vmatprep.subr.mxu0 0.0
    %608 = vmatpush2.xpose.msra.mxu0 0.0
    %609 = vmatprep.subr.mxu0 0.0
    %610 = vmatpush2.xpose.msra.mxu0 0.0
    %611 = vmatprep.subr.mxu0 0.0
    %612 = vmatpush2.xpose.msra.mxu0 0.0
    %613 = vmatprep.subr.mxu0 0.0
    %614 = vmatpush2.xpose.msra.mxu0 0.0
    %615 = vmatprep.subr.mxu0 0.0
    %616 = vmatpush2.xpose.msra.mxu0 0.0
    %617 = vmatprep.subr.mxu0 0.0
    %618 = vmatpush2.xpose.msra.mxu0 0.0
    %619 = vmatprep.subr.mxu0 0.0
    %620 = vmatpush2.xpose.msra.mxu0 0.0
    %621 = vmatprep.subr.mxu0 0.0
    %622 = vmatpush2.xpose.msra.mxu0 0.0
    %623 = vmatprep.mubr.f32.mxu0 0.0
    %624 = vmatmul.mubr.f32.gmra.mxu0 %v555
    %v625 = vpop.f32.mrf.mxu0
    %v626 = vadd.f32 0.0, %v625
    %v627 = vpop.f32.mrf.mxu0
    %628 = vdwg.mxu0
    %v629 = vsel %vm52, %v234, 0
    %v631 = vsel %vm52, %v220, 0
    %633 = vmatprep.subr.mxu0 0.0
    %634 = vmatpush1.xpose.msra.mxu0 0.0
    %635 = vmatprep.subr.mxu0 0.0
    %636 = vmatpush1.xpose.msra.mxu0 0.0
    %637 = vmatprep.subr.mxu0 0.0
    %638 = vmatpush1.xpose.msra.mxu0 0.0
    %639 = vmatprep.subr.mxu0 0.0
    %640 = vmatpush1.xpose.msra.mxu0 0.0
    %641 = vmatprep.subr.mxu0 0.0
    %642 = vmatpush1.xpose.msra.mxu0 0.0
    %643 = vmatprep.subr.mxu0 0.0
    %644 = vmatpush1.xpose.msra.mxu0 0.0
    %645 = vmatprep.subr.mxu0 0.0
    %646 = vmatpush1.xpose.msra.mxu0 0.0
    %647 = vmatprep.subr.mxu0 0.0
    %648 = vmatpush1.xpose.msra.mxu0 0.0
    %649 = vmatprep.subr.mxu0 0.0
    %650 = vmatpush1.xpose.msra.mxu0 0.0
    %651 = vmatprep.subr.mxu0 0.0
    %652 = vmatpush1.xpose.msra.mxu0 0.0
    %653 = vmatprep.subr.mxu0 0.0
    %654 = vmatpush1.xpose.msra.mxu0 0.0
    %655 = vmatprep.subr.mxu0 0.0
    %656 = vmatpush1.xpose.msra.mxu0 0.0
    %657 = vmatprep.subr.mxu0 0.0
    %658 = vmatpush1.xpose.msra.mxu0 0.0
    %659 = vmatprep.subr.mxu0 0.0
    %660 = vmatpush1.xpose.msra.mxu0 0.0
    %661 = vmatprep.subr.mxu0 0.0
    %662 = vmatpush1.xpose.msra.mxu0 0.0
    %663 = vmatprep.subr.mxu0 0.0
    %664 = vmatpush1.xpose.msra.mxu0 %v631
    %665 = vmatprep.subr.mxu0 0.0
    %666 = vmatpush2.xpose.msra.mxu0 0.0
    %667 = vmatprep.subr.mxu0 0.0
    %668 = vmatpush2.xpose.msra.mxu0 0.0
    %669 = vmatprep.subr.mxu0 0.0
    %670 = vmatpush2.xpose.msra.mxu0 0.0
    %671 = vmatprep.subr.mxu0 0.0
    %672 = vmatpush2.xpose.msra.mxu0 0.0
    %673 = vmatprep.subr.mxu0 0.0
    %674 = vmatpush2.xpose.msra.mxu0 0.0
    %675 = vmatprep.subr.mxu0 0.0
    %676 = vmatpush2.xpose.msra.mxu0 0.0
    %677 = vmatprep.subr.mxu0 0.0
    %678 = vmatpush2.xpose.msra.mxu0 0.0
    %679 = vmatprep.subr.mxu0 0.0
    %680 = vmatpush2.xpose.msra.mxu0 0.0
    %681 = vmatprep.subr.mxu0 0.0
    %682 = vmatpush2.xpose.msra.mxu0 0.0
    %683 = vmatprep.subr.mxu0 0.0
    %684 = vmatpush2.xpose.msra.mxu0 0.0
    %685 = vmatprep.subr.mxu0 0.0
    %686 = vmatpush2.xpose.msra.mxu0 0.0
    %687 = vmatprep.subr.mxu0 0.0
    %688 = vmatpush2.xpose.msra.mxu0 0.0
    %689 = vmatprep.subr.mxu0 0.0
    %690 = vmatpush2.xpose.msra.mxu0 0.0
    %691 = vmatprep.subr.mxu0 0.0
    %692 = vmatpush2.xpose.msra.mxu0 0.0
    %693 = vmatprep.subr.mxu0 0.0
    %694 = vmatpush2.xpose.msra.mxu0 0.0
    %695 = vmatprep.subr.mxu0 0.0
    %696 = vmatpush2.xpose.msra.mxu0 0.0
    %697 = vmatprep.mubr.f32.mxu0 0.0
    %698 = vmatmul.mubr.f32.gmra.mxu0 %v629
    %v699 = vpop.f32.mrf.mxu0
    %v700 = vadd.f32 0.0, %v699
    %v701 = vpop.f32.mrf.mxu0
    %702 = vdwg.mxu0
    %v703 = vsel %vm52, %v236, 0
    %v705 = vsel %vm52, %v222, 0
    %707 = vmatprep.subr.mxu0 0.0
    %708 = vmatpush1.xpose.msra.mxu0 0.0
    %709 = vmatprep.subr.mxu0 0.0
    %710 = vmatpush1.xpose.msra.mxu0 0.0
    %711 = vmatprep.subr.mxu0 0.0
    %712 = vmatpush1.xpose.msra.mxu0 0.0
    %713 = vmatprep.subr.mxu0 0.0
    %714 = vmatpush1.xpose.msra.mxu0 0.0
    %715 = vmatprep.subr.mxu0 0.0
    %716 = vmatpush1.xpose.msra.mxu0 0.0
    %717 = vmatprep.subr.mxu0 0.0
    %718 = vmatpush1.xpose.msra.mxu0 0.0
    %719 = vmatprep.subr.mxu0 0.0
    %720 = vmatpush1.xpose.msra.mxu0 0.0
    %721 = vmatprep.subr.mxu0 0.0
    %722 = vmatpush1.xpose.msra.mxu0 0.0
    %723 = vmatprep.subr.mxu0 0.0
    %724 = vmatpush1.xpose.msra.mxu0 0.0
    %725 = vmatprep.subr.mxu0 0.0
    %726 = vmatpush1.xpose.msra.mxu0 0.0
    %727 = vmatprep.subr.mxu0 0.0
    %728 = vmatpush1.xpose.msra.mxu0 0.0
    %729 = vmatprep.subr.mxu0 0.0
    %730 = vmatpush1.xpose.msra.mxu0 0.0
    %731 = vmatprep.subr.mxu0 0.0
    %732 = vmatpush1.xpose.msra.mxu0 0.0
    %733 = vmatprep.subr.mxu0 0.0
    %734 = vmatpush1.xpose.msra.mxu0 0.0
    %735 = vmatprep.subr.mxu0 0.0
    %736 = vmatpush1.xpose.msra.mxu0 0.0
    %737 = vmatprep.subr.mxu0 0.0
    %738 = vmatpush1.xpose.msra.mxu0 %v705
    %739 = vmatprep.subr.mxu0 0.0
    %740 = vmatpush2.xpose.msra.mxu0 0.0
    %741 = vmatprep.subr.mxu0 0.0
    %742 = vmatpush2.xpose.msra.mxu0 0.0
    %743 = vmatprep.subr.mxu0 0.0
    %744 = vmatpush2.xpose.msra.mxu0 0.0
    %745 = vmatprep.subr.mxu0 0.0
    %746 = vmatpush2.xpose.msra.mxu0 0.0
    %747 = vmatprep.subr.mxu0 0.0
    %748 = vmatpush2.xpose.msra.mxu0 0.0
    %749 = vmatprep.subr.mxu0 0.0
    %750 = vmatpush2.xpose.msra.mxu0 0.0
    %751 = vmatprep.subr.mxu0 0.0
    %752 = vmatpush2.xpose.msra.mxu0 0.0
    %753 = vmatprep.subr.mxu0 0.0
    %754 = vmatpush2.xpose.msra.mxu0 0.0
    %755 = vmatprep.subr.mxu0 0.0
    %756 = vmatpush2.xpose.msra.mxu0 0.0
    %757 = vmatprep.subr.mxu0 0.0
    %758 = vmatpush2.xpose.msra.mxu0 0.0
    %759 = vmatprep.subr.mxu0 0.0
    %760 = vmatpush2.xpose.msra.mxu0 0.0
    %761 = vmatprep.subr.mxu0 0.0
    %762 = vmatpush2.xpose.msra.mxu0 0.0
    %763 = vmatprep.subr.mxu0 0.0
    %764 = vmatpush2.xpose.msra.mxu0 0.0
    %765 = vmatprep.subr.mxu0 0.0
    %766 = vmatpush2.xpose.msra.mxu0 0.0
    %767 = vmatprep.subr.mxu0 0.0
    %768 = vmatpush2.xpose.msra.mxu0 0.0
    %769 = vmatprep.subr.mxu0 0.0
    %770 = vmatpush2.xpose.msra.mxu0 0.0
    %771 = vmatprep.mubr.f32.mxu0 0.0
    %772 = vmatmul.mubr.f32.gmra.mxu0 %v703
    %v773 = vpop.f32.mrf.mxu0
    %v774 = vadd.f32 0.0, %v773
    %v775 = vpop.f32.mrf.mxu0
    %776 = vdwg.mxu0
    %v777 = vsel %vm52, %v238, 0
    %v779 = vsel %vm52, %v224, 0
    %781 = vmatprep.subr.mxu0 0.0
    %782 = vmatpush1.xpose.msra.mxu0 0.0
    %783 = vmatprep.subr.mxu0 0.0
    %784 = vmatpush1.xpose.msra.mxu0 0.0
    %785 = vmatprep.subr.mxu0 0.0
    %786 = vmatpush1.xpose.msra.mxu0 0.0
    %787 = vmatprep.subr.mxu0 0.0
    %788 = vmatpush1.xpose.msra.mxu0 0.0
    %789 = vmatprep.subr.mxu0 0.0
    %790 = vmatpush1.xpose.msra.mxu0 0.0
    %791 = vmatprep.subr.mxu0 0.0
    %792 = vmatpush1.xpose.msra.mxu0 0.0
    %793 = vmatprep.subr.mxu0 0.0
    %794 = vmatpush1.xpose.msra.mxu0 0.0
    %795 = vmatprep.subr.mxu0 0.0
    %796 = vmatpush1.xpose.msra.mxu0 0.0
    %797 = vmatprep.subr.mxu0 0.0
    %798 = vmatpush1.xpose.msra.mxu0 0.0
    %799 = vmatprep.subr.mxu0 0.0
    %800 = vmatpush1.xpose.msra.mxu0 0.0
    %801 = vmatprep.subr.mxu0 0.0
    %802 = vmatpush1.xpose.msra.mxu0 0.0
    %803 = vmatprep.subr.mxu0 0.0
    %804 = vmatpush1.xpose.msra.mxu0 0.0
    %805 = vmatprep.subr.mxu0 0.0
    %806 = vmatpush1.xpose.msra.mxu0 0.0
    %807 = vmatprep.subr.mxu0 0.0
    %808 = vmatpush1.xpose.msra.mxu0 0.0
    %809 = vmatprep.subr.mxu0 0.0
    %810 = vmatpush1.xpose.msra.mxu0 0.0
    %811 = vmatprep.subr.mxu0 0.0
    %812 = vmatpush1.xpose.msra.mxu0 %v779
    %813 = vmatprep.subr.mxu0 0.0
    %814 = vmatpush2.xpose.msra.mxu0 0.0
    %815 = vmatprep.subr.mxu0 0.0
    %816 = vmatpush2.xpose.msra.mxu0 0.0
    %817 = vmatprep.subr.mxu0 0.0
    %818 = vmatpush2.xpose.msra.mxu0 0.0
    %819 = vmatprep.subr.mxu0 0.0
    %820 = vmatpush2.xpose.msra.mxu0 0.0
    %821 = vmatprep.subr.mxu0 0.0
    %822 = vmatpush2.xpose.msra.mxu0 0.0
    %823 = vmatprep.subr.mxu0 0.0
    %824 = vmatpush2.xpose.msra.mxu0 0.0
    %825 = vmatprep.subr.mxu0 0.0
    %826 = vmatpush2.xpose.msra.mxu0 0.0
    %827 = vmatprep.subr.mxu0 0.0
    %828 = vmatpush2.xpose.msra.mxu0 0.0
    %829 = vmatprep.subr.mxu0 0.0
    %830 = vmatpush2.xpose.msra.mxu0 0.0
    %831 = vmatprep.subr.mxu0 0.0
    %832 = vmatpush2.xpose.msra.mxu0 0.0
    %833 = vmatprep.subr.mxu0 0.0
    %834 = vmatpush2.xpose.msra.mxu0 0.0
    %835 = vmatprep.subr.mxu0 0.0
    %836 = vmatpush2.xpose.msra.mxu0 0.0
    %837 = vmatprep.subr.mxu0 0.0
    %838 = vmatpush2.xpose.msra.mxu0 0.0
    %839 = vmatprep.subr.mxu0 0.0
    %840 = vmatpush2.xpose.msra.mxu0 0.0
    %841 = vmatprep.subr.mxu0 0.0
    %842 = vmatpush2.xpose.msra.mxu0 0.0
    %843 = vmatprep.subr.mxu0 0.0
    %844 = vmatpush2.xpose.msra.mxu0 0.0
    %845 = vmatprep.mubr.f32.mxu0 0.0
    %846 = vmatmul.mubr.f32.gmra.mxu0 %v777
    %v847 = vpop.f32.mrf.mxu0
    %v848 = vadd.f32 0.0, %v847
    %v849 = vpop.f32.mrf.mxu0
    %850 = vdwg.mxu0
    %vm851 = vcmask 64512
    %v852 = vsel %vm851, %v330, -inf
    %853 = vmax.xlane.f32.xlu0 %v852
    %v854 = vpop.xlane.xlu0 %853
    %v855 = vsel %vm851, %v404, -inf
    %856 = vmax.xlane.f32.xlu0 %v855
    %v857 = vpop.xlane.xlu0 %856
    %v858 = vsel %vm851, %v478, -inf
    %859 = vmax.xlane.f32.xlu0 %v858
    %v860 = vpop.xlane.xlu0 %859
    %v861 = vsel %vm851, %v552, -inf
    %862 = vmax.xlane.f32.xlu0 %v861
    %v863 = vpop.xlane.xlu0 %862
    %v864 = vsel %vm851, %v626, -inf
    %865 = vmax.xlane.f32.xlu0 %v864
    %v866 = vpop.xlane.xlu0 %865
    %v867 = vsel %vm851, %v700, -inf
    %868 = vmax.xlane.f32.xlu0 %v867
    %v869 = vpop.xlane.xlu0 %868
    %v870 = vsel %vm851, %v774, -inf
    %871 = vmax.xlane.f32.xlu0 %v870
    %v872 = vpop.xlane.xlu0 %871
    %v873 = vsel %vm851, %v848, -inf
    %874 = vmax.xlane.f32.xlu0 %v873
    %v875 = vpop.xlane.xlu0 %874
    %v876 = vsub.f32 %v330, %v854
    %v877 = vsub.f32 %v404, %v857
    %v878 = vsub.f32 %v478, %v860
    %v879 = vsub.f32 %v552, %v863
    %v880 = vsub.f32 %v626, %v866
    %v881 = vsub.f32 %v700, %v869
    %v882 = vsub.f32 %v774, %v872
    %v883 = vsub.f32 %v848, %v875
    %v884 = vmul.f32 %v876, 1.442695
    %v885 = vpow.pop %v884
    %v886 = vmul.f32 %v877, 1.442695
    %v887 = vpow.pop %v886
    %v888 = vmul.f32 %v878, 1.442695
    %v889 = vpow.pop %v888
    %v890 = vmul.f32 %v879, 1.442695
    %v891 = vpow.pop %v890
    %v892 = vmul.f32 %v880, 1.442695
    %v893 = vpow.pop %v892
    %v894 = vmul.f32 %v881, 1.442695
    %v895 = vpow.pop %v894
    %v896 = vmul.f32 %v882, 1.442695
    %v897 = vpow.pop %v896
    %v898 = vmul.f32 %v883, 1.442695
    %v899 = vpow.pop %v898
    %v900 = vsel %vm851, %v885, 0.0
    %901 = vadd.xlane.f32.xlu0 %v900
    %v902 = vpop.xlane.xlu0 %901
    %v903 = vsel %vm851, %v887, 0.0
    %904 = vadd.xlane.f32.xlu0 %v903
    %v905 = vpop.xlane.xlu0 %904
    %v906 = vsel %vm851, %v889, 0.0
    %907 = vadd.xlane.f32.xlu0 %v906
    %v908 = vpop.xlane.xlu0 %907
    %v909 = vsel %vm851, %v891, 0.0
    %910 = vadd.xlane.f32.xlu0 %v909
    %v911 = vpop.xlane.xlu0 %910
    %v912 = vsel %vm851, %v893, 0.0
    %913 = vadd.xlane.f32.xlu0 %v912
    %v914 = vpop.xlane.xlu0 %913
    %v915 = vsel %vm851, %v895, 0.0
    %916 = vadd.xlane.f32.xlu0 %v915
    %v917 = vpop.xlane.xlu0 %916
    %v918 = vsel %vm851, %v897, 0.0
    %919 = vadd.xlane.f32.xlu0 %v918
    %v920 = vpop.xlane.xlu0 %919
    %v921 = vsel %vm851, %v899, 0.0
    %922 = vadd.xlane.f32.xlu0 %v921
    %v923 = vpop.xlane.xlu0 %922
    %v924 = vrcp.pop %v902
    %v925 = vrcp.pop %v905
    %v926 = vrcp.pop %v908
    %v927 = vrcp.pop %v911
    %v928 = vrcp.pop %v914
    %v929 = vrcp.pop %v917
    %v930 = vrcp.pop %v920
    %v931 = vrcp.pop %v923
    %v932 = vmul.f32 %v885, %v924
    %v933 = vmul.f32 %v887, %v925
    %v934 = vmul.f32 %v889, %v926
    %v935 = vmul.f32 %v891, %v927
    %v936 = vmul.f32 %v893, %v928
    %v937 = vmul.f32 %v895, %v929
    %v938 = vmul.f32 %v897, %v930
    %v939 = vmul.f32 %v899, %v931
    %v941 = vsel %vm851, %v932, 0
    %943 = vmatprep.subr.mxu0 0.0
    %944 = vmatpush1.msra.mxu0 0.0
    %945 = vmatprep.subr.mxu0 0.0
    %946 = vmatpush1.msra.mxu0 0.0
    %947 = vmatprep.subr.mxu0 0.0
    %948 = vmatpush1.msra.mxu0 0.0
    %949 = vmatprep.subr.mxu0 0.0
    %950 = vmatpush1.msra.mxu0 0.0
    %951 = vmatprep.subr.mxu0 0.0
    %952 = vmatpush1.msra.mxu0 0.0
    %953 = vmatprep.subr.mxu0 0.0
    %954 = vmatpush1.msra.mxu0 0.0
    %955 = vmatprep.subr.mxu0 0.0
    %956 = vmatpush1.msra.mxu0 0.0
    %957 = vmatprep.subr.mxu0 0.0
    %958 = vmatpush1.msra.mxu0 0.0
    %959 = vmatprep.subr.mxu0 0.0
    %960 = vmatpush1.msra.mxu0 0.0
    %961 = vmatprep.subr.mxu0 0.0
    %962 = vmatpush1.msra.mxu0 0.0
    %963 = vmatprep.subr.mxu0 0.0
    %964 = vmatpush1.msra.mxu0 0.0
    %965 = vmatprep.subr.mxu0 0.0
    %966 = vmatpush1.msra.mxu0 0.0
    %967 = vmatprep.subr.mxu0 0.0
    %968 = vmatpush1.msra.mxu0 0.0
    %969 = vmatprep.subr.mxu0 0.0
    %970 = vmatpush1.msra.mxu0 0.0
    %971 = vmatprep.subr.mxu0 0.0
    %972 = vmatpush1.msra.mxu0 0.0
    %973 = vmatprep.subr.mxu0 0.0
    %974 = vmatpush1.msra.mxu0 %v203
    %975 = vmatprep.subr.mxu0 0.0
    %976 = vmatpush2.msra.mxu0 0.0
    %977 = vmatprep.subr.mxu0 0.0
    %978 = vmatpush2.msra.mxu0 0.0
    %979 = vmatprep.subr.mxu0 0.0
    %980 = vmatpush2.msra.mxu0 0.0
    %981 = vmatprep.subr.mxu0 0.0
    %982 = vmatpush2.msra.mxu0 0.0
    %983 = vmatprep.subr.mxu0 0.0
    %984 = vmatpush2.msra.mxu0 0.0
    %985 = vmatprep.subr.mxu0 0.0
    %986 = vmatpush2.msra.mxu0 0.0
    %987 = vmatprep.subr.mxu0 0.0
    %988 = vmatpush2.msra.mxu0 0.0
    %989 = vmatprep.subr.mxu0 0.0
    %990 = vmatpush2.msra.mxu0 0.0
    %991 = vmatprep.subr.mxu0 0.0
    %992 = vmatpush2.msra.mxu0 0.0
    %993 = vmatprep.subr.mxu0 0.0
    %994 = vmatpush2.msra.mxu0 0.0
    %995 = vmatprep.subr.mxu0 0.0
    %996 = vmatpush2.msra.mxu0 0.0
    %997 = vmatprep.subr.mxu0 0.0
    %998 = vmatpush2.msra.mxu0 0.0
    %999 = vmatprep.subr.mxu0 0.0
    %1000 = vmatpush2.msra.mxu0 0.0
    %1001 = vmatprep.subr.mxu0 0.0
    %1002 = vmatpush2.msra.mxu0 0.0
    %1003 = vmatprep.subr.mxu0 0.0
    %1004 = vmatpush2.msra.mxu0 0.0
    %1005 = vmatprep.subr.mxu0 0.0
    %1006 = vmatpush2.msra.mxu0 0.0
    %1007 = vmatprep.mubr.f32.mxu0 0.0
    %1008 = vmatmul.mubr.f32.gmra.mxu0 %v941
    %v1009 = vpop.f32.mrf.mxu0
    %v1010 = vadd.f32 0.0, %v1009
    %v1011 = vpop.f32.mrf.mxu0
    %1012 = vdwg.mxu0
    %v1014 = vsel %vm851, %v933, 0
    %1016 = vmatprep.subr.mxu0 0.0
    %1017 = vmatpush1.msra.mxu0 0.0
    %1018 = vmatprep.subr.mxu0 0.0
    %1019 = vmatpush1.msra.mxu0 0.0
    %1020 = vmatprep.subr.mxu0 0.0
    %1021 = vmatpush1.msra.mxu0 0.0
    %1022 = vmatprep.subr.mxu0 0.0
    %1023 = vmatpush1.msra.mxu0 0.0
    %1024 = vmatprep.subr.mxu0 0.0
    %1025 = vmatpush1.msra.mxu0 0.0
    %1026 = vmatprep.subr.mxu0 0.0
    %1027 = vmatpush1.msra.mxu0 0.0
    %1028 = vmatprep.subr.mxu0 0.0
    %1029 = vmatpush1.msra.mxu0 0.0
    %1030 = vmatprep.subr.mxu0 0.0
    %1031 = vmatpush1.msra.mxu0 0.0
    %1032 = vmatprep.subr.mxu0 0.0
    %1033 = vmatpush1.msra.mxu0 0.0
    %1034 = vmatprep.subr.mxu0 0.0
    %1035 = vmatpush1.msra.mxu0 0.0
    %1036 = vmatprep.subr.mxu0 0.0
    %1037 = vmatpush1.msra.mxu0 0.0
    %1038 = vmatprep.subr.mxu0 0.0
    %1039 = vmatpush1.msra.mxu0 0.0
    %1040 = vmatprep.subr.mxu0 0.0
    %1041 = vmatpush1.msra.mxu0 0.0
    %1042 = vmatprep.subr.mxu0 0.0
    %1043 = vmatpush1.msra.mxu0 0.0
    %1044 = vmatprep.subr.mxu0 0.0
    %1045 = vmatpush1.msra.mxu0 0.0
    %1046 = vmatprep.subr.mxu0 0.0
    %1047 = vmatpush1.msra.mxu0 %v208
    %1048 = vmatprep.subr.mxu0 0.0
    %1049 = vmatpush2.msra.mxu0 0.0
    %1050 = vmatprep.subr.mxu0 0.0
    %1051 = vmatpush2.msra.mxu0 0.0
    %1052 = vmatprep.subr.mxu0 0.0
    %1053 = vmatpush2.msra.mxu0 0.0
    %1054 = vmatprep.subr.mxu0 0.0
    %1055 = vmatpush2.msra.mxu0 0.0
    %1056 = vmatprep.subr.mxu0 0.0
    %1057 = vmatpush2.msra.mxu0 0.0
    %1058 = vmatprep.subr.mxu0 0.0
    %1059 = vmatpush2.msra.mxu0 0.0
    %1060 = vmatprep.subr.mxu0 0.0
    %1061 = vmatpush2.msra.mxu0 0.0
    %1062 = vmatprep.subr.mxu0 0.0
    %1063 = vmatpush2.msra.mxu0 0.0
    %1064 = vmatprep.subr.mxu0 0.0
    %1065 = vmatpush2.msra.mxu0 0.0
    %1066 = vmatprep.subr.mxu0 0.0
    %1067 = vmatpush2.msra.mxu0 0.0
    %1068 = vmatprep.subr.mxu0 0.0
    %1069 = vmatpush2.msra.mxu0 0.0
    %1070 = vmatprep.subr.mxu0 0.0
    %1071 = vmatpush2.msra.mxu0 0.0
    %1072 = vmatprep.subr.mxu0 0.0
    %1073 = vmatpush2.msra.mxu0 0.0
    %1074 = vmatprep.subr.mxu0 0.0
    %1075 = vmatpush2.msra.mxu0 0.0
    %1076 = vmatprep.subr.mxu0 0.0
    %1077 = vmatpush2.msra.mxu0 0.0
    %1078 = vmatprep.subr.mxu0 0.0
    %1079 = vmatpush2.msra.mxu0 0.0
    %1080 = vmatprep.mubr.f32.mxu0 0.0
    %1081 = vmatmul.mubr.f32.gmra.mxu0 %v1014
    %v1082 = vpop.f32.mrf.mxu0
    %v1083 = vadd.f32 0.0, %v1082
    %v1084 = vpop.f32.mrf.mxu0
    %1085 = vdwg.mxu0
    %v1087 = vsel %vm851, %v934, 0
    %1089 = vmatprep.subr.mxu0 0.0
    %1090 = vmatpush1.msra.mxu0 0.0
    %1091 = vmatprep.subr.mxu0 0.0
    %1092 = vmatpush1.msra.mxu0 0.0
    %1093 = vmatprep.subr.mxu0 0.0
    %1094 = vmatpush1.msra.mxu0 0.0
    %1095 = vmatprep.subr.mxu0 0.0
    %1096 = vmatpush1.msra.mxu0 0.0
    %1097 = vmatprep.subr.mxu0 0.0
    %1098 = vmatpush1.msra.mxu0 0.0
    %1099 = vmatprep.subr.mxu0 0.0
    %1100 = vmatpush1.msra.mxu0 0.0
    %1101 = vmatprep.subr.mxu0 0.0
    %1102 = vmatpush1.msra.mxu0 0.0
    %1103 = vmatprep.subr.mxu0 0.0
    %1104 = vmatpush1.msra.mxu0 0.0
    %1105 = vmatprep.subr.mxu0 0.0
    %1106 = vmatpush1.msra.mxu0 0.0
    %1107 = vmatprep.subr.mxu0 0.0
    %1108 = vmatpush1.msra.mxu0 0.0
    %1109 = vmatprep.subr.mxu0 0.0
    %1110 = vmatpush1.msra.mxu0 0.0
    %1111 = vmatprep.subr.mxu0 0.0
    %1112 = vmatpush1.msra.mxu0 0.0
    %1113 = vmatprep.subr.mxu0 0.0
    %1114 = vmatpush1.msra.mxu0 0.0
    %1115 = vmatprep.subr.mxu0 0.0
    %1116 = vmatpush1.msra.mxu0 0.0
    %1117 = vmatprep.subr.mxu0 0.0
    %1118 = vmatpush1.msra.mxu0 0.0
    %1119 = vmatprep.subr.mxu0 0.0
    %1120 = vmatpush1.msra.mxu0 %v242
    %1121 = vmatprep.subr.mxu0 0.0
    %1122 = vmatpush2.msra.mxu0 0.0
    %1123 = vmatprep.subr.mxu0 0.0
    %1124 = vmatpush2.msra.mxu0 0.0
    %1125 = vmatprep.subr.mxu0 0.0
    %1126 = vmatpush2.msra.mxu0 0.0
    %1127 = vmatprep.subr.mxu0 0.0
    %1128 = vmatpush2.msra.mxu0 0.0
    %1129 = vmatprep.subr.mxu0 0.0
    %1130 = vmatpush2.msra.mxu0 0.0
    %1131 = vmatprep.subr.mxu0 0.0
    %1132 = vmatpush2.msra.mxu0 0.0
    %1133 = vmatprep.subr.mxu0 0.0
    %1134 = vmatpush2.msra.mxu0 0.0
    %1135 = vmatprep.subr.mxu0 0.0
    %1136 = vmatpush2.msra.mxu0 0.0
    %1137 = vmatprep.subr.mxu0 0.0
    %1138 = vmatpush2.msra.mxu0 0.0
    %1139 = vmatprep.subr.mxu0 0.0
    %1140 = vmatpush2.msra.mxu0 0.0
    %1141 = vmatprep.subr.mxu0 0.0
    %1142 = vmatpush2.msra.mxu0 0.0
    %1143 = vmatprep.subr.mxu0 0.0
    %1144 = vmatpush2.msra.mxu0 0.0
    %1145 = vmatprep.subr.mxu0 0.0
    %1146 = vmatpush2.msra.mxu0 0.0
    %1147 = vmatprep.subr.mxu0 0.0
    %1148 = vmatpush2.msra.mxu0 0.0
    %1149 = vmatprep.subr.mxu0 0.0
    %1150 = vmatpush2.msra.mxu0 0.0
    %1151 = vmatprep.subr.mxu0 0.0
    %1152 = vmatpush2.msra.mxu0 0.0
    %1153 = vmatprep.mubr.f32.mxu0 0.0
    %1154 = vmatmul.mubr.f32.gmra.mxu0 %v1087
    %v1155 = vpop.f32.mrf.mxu0
    %v1156 = vadd.f32 0.0, %v1155
    %v1157 = vpop.f32.mrf.mxu0
    %1158 = vdwg.mxu0
    %v1160 = vsel %vm851, %v935, 0
    %1162 = vmatprep.subr.mxu0 0.0
    %1163 = vmatpush1.msra.mxu0 0.0
    %1164 = vmatprep.subr.mxu0 0.0
    %1165 = vmatpush1.msra.mxu0 0.0
    %1166 = vmatprep.subr.mxu0 0.0
    %1167 = vmatpush1.msra.mxu0 0.0
    %1168 = vmatprep.subr.mxu0 0.0
    %1169 = vmatpush1.msra.mxu0 0.0
    %1170 = vmatprep.subr.mxu0 0.0
    %1171 = vmatpush1.msra.mxu0 0.0
    %1172 = vmatprep.subr.mxu0 0.0
    %1173 = vmatpush1.msra.mxu0 0.0
    %1174 = vmatprep.subr.mxu0 0.0
    %1175 = vmatpush1.msra.mxu0 0.0
    %1176 = vmatprep.subr.mxu0 0.0
    %1177 = vmatpush1.msra.mxu0 0.0
    %1178 = vmatprep.subr.mxu0 0.0
    %1179 = vmatpush1.msra.mxu0 0.0
    %1180 = vmatprep.subr.mxu0 0.0
    %1181 = vmatpush1.msra.mxu0 0.0
    %1182 = vmatprep.subr.mxu0 0.0
    %1183 = vmatpush1.msra.mxu0 0.0
    %1184 = vmatprep.subr.mxu0 0.0
    %1185 = vmatpush1.msra.mxu0 0.0
    %1186 = vmatprep.subr.mxu0 0.0
    %1187 = vmatpush1.msra.mxu0 0.0
    %1188 = vmatprep.subr.mxu0 0.0
    %1189 = vmatpush1.msra.mxu0 0.0
    %1190 = vmatprep.subr.mxu0 0.0
    %1191 = vmatpush1.msra.mxu0 0.0
    %1192 = vmatprep.subr.mxu0 0.0
    %1193 = vmatpush1.msra.mxu0 %v244
    %1194 = vmatprep.subr.mxu0 0.0
    %1195 = vmatpush2.msra.mxu0 0.0
    %1196 = vmatprep.subr.mxu0 0.0
    %1197 = vmatpush2.msra.mxu0 0.0
    %1198 = vmatprep.subr.mxu0 0.0
    %1199 = vmatpush2.msra.mxu0 0.0
    %1200 = vmatprep.subr.mxu0 0.0
    %1201 = vmatpush2.msra.mxu0 0.0
    %1202 = vmatprep.subr.mxu0 0.0
    %1203 = vmatpush2.msra.mxu0 0.0
    %1204 = vmatprep.subr.mxu0 0.0
    %1205 = vmatpush2.msra.mxu0 0.0
    %1206 = vmatprep.subr.mxu0 0.0
    %1207 = vmatpush2.msra.mxu0 0.0
    %1208 = vmatprep.subr.mxu0 0.0
    %1209 = vmatpush2.msra.mxu0 0.0
    %1210 = vmatprep.subr.mxu0 0.0
    %1211 = vmatpush2.msra.mxu0 0.0
    %1212 = vmatprep.subr.mxu0 0.0
    %1213 = vmatpush2.msra.mxu0 0.0
    %1214 = vmatprep.subr.mxu0 0.0
    %1215 = vmatpush2.msra.mxu0 0.0
    %1216 = vmatprep.subr.mxu0 0.0
    %1217 = vmatpush2.msra.mxu0 0.0
    %1218 = vmatprep.subr.mxu0 0.0
    %1219 = vmatpush2.msra.mxu0 0.0
    %1220 = vmatprep.subr.mxu0 0.0
    %1221 = vmatpush2.msra.mxu0 0.0
    %1222 = vmatprep.subr.mxu0 0.0
    %1223 = vmatpush2.msra.mxu0 0.0
    %1224 = vmatprep.subr.mxu0 0.0
    %1225 = vmatpush2.msra.mxu0 0.0
    %1226 = vmatprep.mubr.f32.mxu0 0.0
    %1227 = vmatmul.mubr.f32.gmra.mxu0 %v1160
    %v1228 = vpop.f32.mrf.mxu0
    %v1229 = vadd.f32 0.0, %v1228
    %v1230 = vpop.f32.mrf.mxu0
    %1231 = vdwg.mxu0
    %v1233 = vsel %vm851, %v936, 0
    %1235 = vmatprep.subr.mxu0 0.0
    %1236 = vmatpush1.msra.mxu0 0.0
    %1237 = vmatprep.subr.mxu0 0.0
    %1238 = vmatpush1.msra.mxu0 0.0
    %1239 = vmatprep.subr.mxu0 0.0
    %1240 = vmatpush1.msra.mxu0 0.0
    %1241 = vmatprep.subr.mxu0 0.0
    %1242 = vmatpush1.msra.mxu0 0.0
    %1243 = vmatprep.subr.mxu0 0.0
    %1244 = vmatpush1.msra.mxu0 0.0
    %1245 = vmatprep.subr.mxu0 0.0
    %1246 = vmatpush1.msra.mxu0 0.0
    %1247 = vmatprep.subr.mxu0 0.0
    %1248 = vmatpush1.msra.mxu0 0.0
    %1249 = vmatprep.subr.mxu0 0.0
    %1250 = vmatpush1.msra.mxu0 0.0
    %1251 = vmatprep.subr.mxu0 0.0
    %1252 = vmatpush1.msra.mxu0 0.0
    %1253 = vmatprep.subr.mxu0 0.0
    %1254 = vmatpush1.msra.mxu0 0.0
    %1255 = vmatprep.subr.mxu0 0.0
    %1256 = vmatpush1.msra.mxu0 0.0
    %1257 = vmatprep.subr.mxu0 0.0
    %1258 = vmatpush1.msra.mxu0 0.0
    %1259 = vmatprep.subr.mxu0 0.0
    %1260 = vmatpush1.msra.mxu0 0.0
    %1261 = vmatprep.subr.mxu0 0.0
    %1262 = vmatpush1.msra.mxu0 0.0
    %1263 = vmatprep.subr.mxu0 0.0
    %1264 = vmatpush1.msra.mxu0 0.0
    %1265 = vmatprep.subr.mxu0 0.0
    %1266 = vmatpush1.msra.mxu0 %v248
    %1267 = vmatprep.subr.mxu0 0.0
    %1268 = vmatpush2.msra.mxu0 0.0
    %1269 = vmatprep.subr.mxu0 0.0
    %1270 = vmatpush2.msra.mxu0 0.0
    %1271 = vmatprep.subr.mxu0 0.0
    %1272 = vmatpush2.msra.mxu0 0.0
    %1273 = vmatprep.subr.mxu0 0.0
    %1274 = vmatpush2.msra.mxu0 0.0
    %1275 = vmatprep.subr.mxu0 0.0
    %1276 = vmatpush2.msra.mxu0 0.0
    %1277 = vmatprep.subr.mxu0 0.0
    %1278 = vmatpush2.msra.mxu0 0.0
    %1279 = vmatprep.subr.mxu0 0.0
    %1280 = vmatpush2.msra.mxu0 0.0
    %1281 = vmatprep.subr.mxu0 0.0
    %1282 = vmatpush2.msra.mxu0 0.0
    %1283 = vmatprep.subr.mxu0 0.0
    %1284 = vmatpush2.msra.mxu0 0.0
    %1285 = vmatprep.subr.mxu0 0.0
    %1286 = vmatpush2.msra.mxu0 0.0
    %1287 = vmatprep.subr.mxu0 0.0
    %1288 = vmatpush2.msra.mxu0 0.0
    %1289 = vmatprep.subr.mxu0 0.0
    %1290 = vmatpush2.msra.mxu0 0.0
    %1291 = vmatprep.subr.mxu0 0.0
    %1292 = vmatpush2.msra.mxu0 0.0
    %1293 = vmatprep.subr.mxu0 0.0
    %1294 = vmatpush2.msra.mxu0 0.0
    %1295 = vmatprep.subr.mxu0 0.0
    %1296 = vmatpush2.msra.mxu0 0.0
    %1297 = vmatprep.subr.mxu0 0.0
    %1298 = vmatpush2.msra.mxu0 0.0
    %1299 = vmatprep.mubr.f32.mxu0 0.0
    %1300 = vmatmul.mubr.f32.gmra.mxu0 %v1233
    %v1301 = vpop.f32.mrf.mxu0
    %v1302 = vadd.f32 0.0, %v1301
    %v1303 = vpop.f32.mrf.mxu0
    %1304 = vdwg.mxu0
    %v1306 = vsel %vm851, %v937, 0
    %1308 = vmatprep.subr.mxu0 0.0
    %1309 = vmatpush1.msra.mxu0 0.0
    %1310 = vmatprep.subr.mxu0 0.0
    %1311 = vmatpush1.msra.mxu0 0.0
    %1312 = vmatprep.subr.mxu0 0.0
    %1313 = vmatpush1.msra.mxu0 0.0
    %1314 = vmatprep.subr.mxu0 0.0
    %1315 = vmatpush1.msra.mxu0 0.0
    %1316 = vmatprep.subr.mxu0 0.0
    %1317 = vmatpush1.msra.mxu0 0.0
    %1318 = vmatprep.subr.mxu0 0.0
    %1319 = vmatpush1.msra.mxu0 0.0
    %1320 = vmatprep.subr.mxu0 0.0
    %1321 = vmatpush1.msra.mxu0 0.0
    %1322 = vmatprep.subr.mxu0 0.0
    %1323 = vmatpush1.msra.mxu0 0.0
    %1324 = vmatprep.subr.mxu0 0.0
    %1325 = vmatpush1.msra.mxu0 0.0
    %1326 = vmatprep.subr.mxu0 0.0
    %1327 = vmatpush1.msra.mxu0 0.0
    %1328 = vmatprep.subr.mxu0 0.0
    %1329 = vmatpush1.msra.mxu0 0.0
    %1330 = vmatprep.subr.mxu0 0.0
    %1331 = vmatpush1.msra.mxu0 0.0
    %1332 = vmatprep.subr.mxu0 0.0
    %1333 = vmatpush1.msra.mxu0 0.0
    %1334 = vmatprep.subr.mxu0 0.0
    %1335 = vmatpush1.msra.mxu0 0.0
    %1336 = vmatprep.subr.mxu0 0.0
    %1337 = vmatpush1.msra.mxu0 0.0
    %1338 = vmatprep.subr.mxu0 0.0
    %1339 = vmatpush1.msra.mxu0 %v250
    %1340 = vmatprep.subr.mxu0 0.0
    %1341 = vmatpush2.msra.mxu0 0.0
    %1342 = vmatprep.subr.mxu0 0.0
    %1343 = vmatpush2.msra.mxu0 0.0
    %1344 = vmatprep.subr.mxu0 0.0
    %1345 = vmatpush2.msra.mxu0 0.0
    %1346 = vmatprep.subr.mxu0 0.0
    %1347 = vmatpush2.msra.mxu0 0.0
    %1348 = vmatprep.subr.mxu0 0.0
    %1349 = vmatpush2.msra.mxu0 0.0
    %1350 = vmatprep.subr.mxu0 0.0
    %1351 = vmatpush2.msra.mxu0 0.0
    %1352 = vmatprep.subr.mxu0 0.0
    %1353 = vmatpush2.msra.mxu0 0.0
    %1354 = vmatprep.subr.mxu0 0.0
    %1355 = vmatpush2.msra.mxu0 0.0
    %1356 = vmatprep.subr.mxu0 0.0
    %1357 = vmatpush2.msra.mxu0 0.0
    %1358 = vmatprep.subr.mxu0 0.0
    %1359 = vmatpush2.msra.mxu0 0.0
    %1360 = vmatprep.subr.mxu0 0.0
    %1361 = vmatpush2.msra.mxu0 0.0
    %1362 = vmatprep.subr.mxu0 0.0
    %1363 = vmatpush2.msra.mxu0 0.0
    %1364 = vmatprep.subr.mxu0 0.0
    %1365 = vmatpush2.msra.mxu0 0.0
    %1366 = vmatprep.subr.mxu0 0.0
    %1367 = vmatpush2.msra.mxu0 0.0
    %1368 = vmatprep.subr.mxu0 0.0
    %1369 = vmatpush2.msra.mxu0 0.0
    %1370 = vmatprep.subr.mxu0 0.0
    %1371 = vmatpush2.msra.mxu0 0.0
    %1372 = vmatprep.mubr.f32.mxu0 0.0
    %1373 = vmatmul.mubr.f32.gmra.mxu0 %v1306
    %v1374 = vpop.f32.mrf.mxu0
    %v1375 = vadd.f32 0.0, %v1374
    %v1376 = vpop.f32.mrf.mxu0
    %1377 = vdwg.mxu0
    %v1379 = vsel %vm851, %v938, 0
    %1381 = vmatprep.subr.mxu0 0.0
    %1382 = vmatpush1.msra.mxu0 0.0
    %1383 = vmatprep.subr.mxu0 0.0
    %1384 = vmatpush1.msra.mxu0 0.0
    %1385 = vmatprep.subr.mxu0 0.0
    %1386 = vmatpush1.msra.mxu0 0.0
    %1387 = vmatprep.subr.mxu0 0.0
    %1388 = vmatpush1.msra.mxu0 0.0
    %1389 = vmatprep.subr.mxu0 0.0
    %1390 = vmatpush1.msra.mxu0 0.0
    %1391 = vmatprep.subr.mxu0 0.0
    %1392 = vmatpush1.msra.mxu0 0.0
    %1393 = vmatprep.subr.mxu0 0.0
    %1394 = vmatpush1.msra.mxu0 0.0
    %1395 = vmatprep.subr.mxu0 0.0
    %1396 = vmatpush1.msra.mxu0 0.0
    %1397 = vmatprep.subr.mxu0 0.0
    %1398 = vmatpush1.msra.mxu0 0.0
    %1399 = vmatprep.subr.mxu0 0.0
    %1400 = vmatpush1.msra.mxu0 0.0
    %1401 = vmatprep.subr.mxu0 0.0
    %1402 = vmatpush1.msra.mxu0 0.0
    %1403 = vmatprep.subr.mxu0 0.0
    %1404 = vmatpush1.msra.mxu0 0.0
    %1405 = vmatprep.subr.mxu0 0.0
    %1406 = vmatpush1.msra.mxu0 0.0
    %1407 = vmatprep.subr.mxu0 0.0
    %1408 = vmatpush1.msra.mxu0 0.0
    %1409 = vmatprep.subr.mxu0 0.0
    %1410 = vmatpush1.msra.mxu0 0.0
    %1411 = vmatprep.subr.mxu0 0.0
    %1412 = vmatpush1.msra.mxu0 %v254
    %1413 = vmatprep.subr.mxu0 0.0
    %1414 = vmatpush2.msra.mxu0 0.0
    %1415 = vmatprep.subr.mxu0 0.0
    %1416 = vmatpush2.msra.mxu0 0.0
    %1417 = vmatprep.subr.mxu0 0.0
    %1418 = vmatpush2.msra.mxu0 0.0
    %1419 = vmatprep.subr.mxu0 0.0
    %1420 = vmatpush2.msra.mxu0 0.0
    %1421 = vmatprep.subr.mxu0 0.0
    %1422 = vmatpush2.msra.mxu0 0.0
    %1423 = vmatprep.subr.mxu0 0.0
    %1424 = vmatpush2.msra.mxu0 0.0
    %1425 = vmatprep.subr.mxu0 0.0
    %1426 = vmatpush2.msra.mxu0 0.0
    %1427 = vmatprep.subr.mxu0 0.0
    %1428 = vmatpush2.msra.mxu0 0.0
    %1429 = vmatprep.subr.mxu0 0.0
    %1430 = vmatpush2.msra.mxu0 0.0
    %1431 = vmatprep.subr.mxu0 0.0
    %1432 = vmatpush2.msra.mxu0 0.0
    %1433 = vmatprep.subr.mxu0 0.0
    %1434 = vmatpush2.msra.mxu0 0.0
    %1435 = vmatprep.subr.mxu0 0.0
    %1436 = vmatpush2.msra.mxu0 0.0
    %1437 = vmatprep.subr.mxu0 0.0
    %1438 = vmatpush2.msra.mxu0 0.0
    %1439 = vmatprep.subr.mxu0 0.0
    %1440 = vmatpush2.msra.mxu0 0.0
    %1441 = vmatprep.subr.mxu0 0.0
    %1442 = vmatpush2.msra.mxu0 0.0
    %1443 = vmatprep.subr.mxu0 0.0
    %1444 = vmatpush2.msra.mxu0 0.0
    %1445 = vmatprep.mubr.f32.mxu0 0.0
    %1446 = vmatmul.mubr.f32.gmra.mxu0 %v1379
    %v1447 = vpop.f32.mrf.mxu0
    %v1448 = vadd.f32 0.0, %v1447
    %v1449 = vpop.f32.mrf.mxu0
    %1450 = vdwg.mxu0
    %v1452 = vsel %vm851, %v939, 0
    %1454 = vmatprep.subr.mxu0 0.0
    %1455 = vmatpush1.msra.mxu0 0.0
    %1456 = vmatprep.subr.mxu0 0.0
    %1457 = vmatpush1.msra.mxu0 0.0
    %1458 = vmatprep.subr.mxu0 0.0
    %1459 = vmatpush1.msra.mxu0 0.0
    %1460 = vmatprep.subr.mxu0 0.0
    %1461 = vmatpush1.msra.mxu0 0.0
    %1462 = vmatprep.subr.mxu0 0.0
    %1463 = vmatpush1.msra.mxu0 0.0
    %1464 = vmatprep.subr.mxu0 0.0
    %1465 = vmatpush1.msra.mxu0 0.0
    %1466 = vmatprep.subr.mxu0 0.0
    %1467 = vmatpush1.msra.mxu0 0.0
    %1468 = vmatprep.subr.mxu0 0.0
    %1469 = vmatpush1.msra.mxu0 0.0
    %1470 = vmatprep.subr.mxu0 0.0
    %1471 = vmatpush1.msra.mxu0 0.0
    %1472 = vmatprep.subr.mxu0 0.0
    %1473 = vmatpush1.msra.mxu0 0.0
    %1474 = vmatprep.subr.mxu0 0.0
    %1475 = vmatpush1.msra.mxu0 0.0
    %1476 = vmatprep.subr.mxu0 0.0
    %1477 = vmatpush1.msra.mxu0 0.0
    %1478 = vmatprep.subr.mxu0 0.0
    %1479 = vmatpush1.msra.mxu0 0.0
    %1480 = vmatprep.subr.mxu0 0.0
    %1481 = vmatpush1.msra.mxu0 0.0
    %1482 = vmatprep.subr.mxu0 0.0
    %1483 = vmatpush1.msra.mxu0 0.0
    %1484 = vmatprep.subr.mxu0 0.0
    %1485 = vmatpush1.msra.mxu0 %v256
    %1486 = vmatprep.subr.mxu0 0.0
    %1487 = vmatpush2.msra.mxu0 0.0
    %1488 = vmatprep.subr.mxu0 0.0
    %1489 = vmatpush2.msra.mxu0 0.0
    %1490 = vmatprep.subr.mxu0 0.0
    %1491 = vmatpush2.msra.mxu0 0.0
    %1492 = vmatprep.subr.mxu0 0.0
    %1493 = vmatpush2.msra.mxu0 0.0
    %1494 = vmatprep.subr.mxu0 0.0
    %1495 = vmatpush2.msra.mxu0 0.0
    %1496 = vmatprep.subr.mxu0 0.0
    %1497 = vmatpush2.msra.mxu0 0.0
    %1498 = vmatprep.subr.mxu0 0.0
    %1499 = vmatpush2.msra.mxu0 0.0
    %1500 = vmatprep.subr.mxu0 0.0
    %1501 = vmatpush2.msra.mxu0 0.0
    %1502 = vmatprep.subr.mxu0 0.0
    %1503 = vmatpush2.msra.mxu0 0.0
    %1504 = vmatprep.subr.mxu0 0.0
    %1505 = vmatpush2.msra.mxu0 0.0
    %1506 = vmatprep.subr.mxu0 0.0
    %1507 = vmatpush2.msra.mxu0 0.0
    %1508 = vmatprep.subr.mxu0 0.0
    %1509 = vmatpush2.msra.mxu0 0.0
    %1510 = vmatprep.subr.mxu0 0.0
    %1511 = vmatpush2.msra.mxu0 0.0
    %1512 = vmatprep.subr.mxu0 0.0
    %1513 = vmatpush2.msra.mxu0 0.0
    %1514 = vmatprep.subr.mxu0 0.0
    %1515 = vmatpush2.msra.mxu0 0.0
    %1516 = vmatprep.subr.mxu0 0.0
    %1517 = vmatpush2.msra.mxu0 0.0
    %1518 = vmatprep.mubr.f32.mxu0 0.0
    %1519 = vmatmul.mubr.f32.gmra.mxu0 %v1452
    %v1520 = vpop.f32.mrf.mxu0
    %v1521 = vadd.f32 0.0, %v1520
    %v1522 = vpop.f32.mrf.mxu0
    %1523 = vdwg.mxu0
    %1526 = vrot.lane.b32.xlu0 %v1156, 32
    %v1527 = vpop.permute.xlu0 %1526
    %1528 = vrot.lane.b32.xlu0 %v1229, 32
    %v1529 = vpop.permute.xlu0 %1528
    %1534 = vrot.lane.b32.xlu0 %v1302, 64
    %v1535 = vpop.permute.xlu0 %1534
    %1536 = vrot.lane.b32.xlu0 %v1375, 64
    %v1537 = vpop.permute.xlu0 %1536
    %1542 = vrot.lane.b32.xlu0 %v1448, 96
    %v1543 = vpop.permute.xlu0 %1542
    %1544 = vrot.lane.b32.xlu0 %v1521, 96
    %v1545 = vpop.permute.xlu0 %1544
    %v1548 = vsel %vm52, %v1010, %v1527
    %v1549 = vsel %vm52, %v1083, %v1529
    %vm1550 = vcmask 523264
    %v1551 = vsel %vm1550, %v1548, %v1535
    %v1552 = vsel %vm1550, %v1549, %v1537
    %vm1553 = vcmask 785408
    %v1554 = vsel %vm1553, %v1551, %v1543
    %v1555 = vsel %vm1553, %v1552, %v1545
    %v1556 = vld [vmem:[%s3] sm:$0xff]
    %v1557 = vld [vmem:[%s3 + $0x8] sm:$0xff]
    %v1558 = vld [vmem:[%s3 + $0x10] sm:$0xff]
    %v1559 = vld [vmem:[%s3 + $0x18] sm:$0xff]
    %v1560 = vld [vmem:[%s3 + $0x20] sm:$0xff]
    %v1561 = vld [vmem:[%s3 + $0x28] sm:$0xff]
    %v1562 = vld [vmem:[%s3 + $0x30] sm:$0xff]
    %v1563 = vld [vmem:[%s3 + $0x38] sm:$0xff]
    %v1564 = vld [vmem:[%s3 + $0x40] sm:$0xff]
    %v1565 = vld [vmem:[%s3 + $0x48] sm:$0xff]
    %v1566 = vld [vmem:[%s3 + $0x50] sm:$0xff]
    %v1567 = vld [vmem:[%s3 + $0x58] sm:$0xff]
    %v1568 = vld [vmem:[%s3 + $0x60] sm:$0xff]
    %v1569 = vld [vmem:[%s3 + $0x68] sm:$0xff]
    %v1570 = vld [vmem:[%s3 + $0x70] sm:$0xff]
    %v1571 = vld [vmem:[%s3 + $0x78] sm:$0xff]
    %v1572 = vld [vmem:[%s4] sm:$0x1]
    %v1574 = vlaneseq
    %v1575 = vshrl.u32 %v1574, 7
    %v1576 = vsub.s32 0, %v1575
    %v1577 = vrot.slane %v1572, %v1576
    %1579 = vmatprep.subr.mxu0 0.0
    %1580 = vmatpush1.msra.mxu0 %v1571
    %1581 = vmatprep.subr.mxu0 0.0
    %1582 = vmatpush1.msra.mxu0 %v1570
    %1583 = vmatprep.subr.mxu0 0.0
    %1584 = vmatpush1.msra.mxu0 %v1569
    %1585 = vmatprep.subr.mxu0 0.0
    %1586 = vmatpush1.msra.mxu0 %v1568
    %1587 = vmatprep.subr.mxu0 0.0
    %1588 = vmatpush1.msra.mxu0 %v1567
    %1589 = vmatprep.subr.mxu0 0.0
    %1590 = vmatpush1.msra.mxu0 %v1566
    %1591 = vmatprep.subr.mxu0 0.0
    %1592 = vmatpush1.msra.mxu0 %v1565
    %1593 = vmatprep.subr.mxu0 0.0
    %1594 = vmatpush1.msra.mxu0 %v1564
    %1595 = vmatprep.subr.mxu0 0.0
    %1596 = vmatpush1.msra.mxu0 %v1563
    %1597 = vmatprep.subr.mxu0 0.0
    %1598 = vmatpush1.msra.mxu0 %v1562
    %1599 = vmatprep.subr.mxu0 0.0
    %1600 = vmatpush1.msra.mxu0 %v1561
    %1601 = vmatprep.subr.mxu0 0.0
    %1602 = vmatpush1.msra.mxu0 %v1560
    %1603 = vmatprep.subr.mxu0 0.0
    %1604 = vmatpush1.msra.mxu0 %v1559
    %1605 = vmatprep.subr.mxu0 0.0
    %1606 = vmatpush1.msra.mxu0 %v1558
    %1607 = vmatprep.subr.mxu0 0.0
    %1608 = vmatpush1.msra.mxu0 %v1557
    %1609 = vmatprep.subr.mxu0 0.0
    %1610 = vmatpush1.msra.mxu0 %v1556
    %1611 = vmatprep.subr.mxu0 0.0
    %1612 = vmatpush2.msra.mxu0 0.0
    %1613 = vmatprep.subr.mxu0 0.0
    %1614 = vmatpush2.msra.mxu0 0.0
    %1615 = vmatprep.subr.mxu0 0.0
    %1616 = vmatpush2.msra.mxu0 0.0
    %1617 = vmatprep.subr.mxu0 0.0
    %1618 = vmatpush2.msra.mxu0 0.0
    %1619 = vmatprep.subr.mxu0 0.0
    %1620 = vmatpush2.msra.mxu0 0.0
    %1621 = vmatprep.subr.mxu0 0.0
    %1622 = vmatpush2.msra.mxu0 0.0
    %1623 = vmatprep.subr.mxu0 0.0
    %1624 = vmatpush2.msra.mxu0 0.0
    %1625 = vmatprep.subr.mxu0 0.0
    %1626 = vmatpush2.msra.mxu0 0.0
    %1627 = vmatprep.subr.mxu0 0.0
    %1628 = vmatpush2.msra.mxu0 0.0
    %1629 = vmatprep.subr.mxu0 0.0
    %1630 = vmatpush2.msra.mxu0 0.0
    %1631 = vmatprep.subr.mxu0 0.0
    %1632 = vmatpush2.msra.mxu0 0.0
    %1633 = vmatprep.subr.mxu0 0.0
    %1634 = vmatpush2.msra.mxu0 0.0
    %1635 = vmatprep.subr.mxu0 0.0
    %1636 = vmatpush2.msra.mxu0 0.0
    %1637 = vmatprep.subr.mxu0 0.0
    %1638 = vmatpush2.msra.mxu0 0.0
    %1639 = vmatprep.subr.mxu0 0.0
    %1640 = vmatpush2.msra.mxu0 0.0
    %1641 = vmatprep.subr.mxu0 0.0
    %1642 = vmatpush2.msra.mxu0 0.0
    %1643 = vmatprep.mubr.f32.mxu0 0.0
    %1644 = vmatmul.mubr.f32.gmra.mxu0 %v1554
    %v1645 = vpop.f32.mrf.mxu0
    %v1646 = vadd.f32 %v1577, %v1645
    %v1647 = vpop.f32.mrf.mxu0
    %1648 = vmatprep.mubr.f32.mxu0 0.0
    %1649 = vmatmul.mubr.f32.gmra.mxu0 %v1555
    %v1650 = vpop.f32.mrf.mxu0
    %v1651 = vadd.f32 %v1577, %v1650
    %v1652 = vpop.f32.mrf.mxu0
    %1653 = vdwg.mxu0
    %1654 = vst.msk [vmem:[#allocation2] sm:$0xff] %vm52, %v1646
    %1655 = vst.msk [vmem:[#allocation2 + $0x8] sm:$0xff] %vm52, %v1651
    // Predicated region
    $region22: #{tpu_custom_call.1} parent=1 // pred_check
      _
    $region23: #{tpu_custom_call.1} parent=1 // pred_check_branch
      %1657 = sbr.rel (0) target = $region25
    $region24: #{tpu_custom_call.1} parent=1 // pred_region
      %s1659 = ssub.s32 256, 256
      %1660 = vsyncadd [#allocation3], %s1659
      %s1661 = sshll.u32 [#allocation2], 4
      %s1662 = int_to_ptr.vmem [resolvable:$true] %s1661
      %1667 = dma.vmem_to_hbm [thread:$0]  %s1662, 256, %s5, [#allocation3], 128, 128, 8
    $region25: #{tpu_custom_call.1} parent=1 // pred_fallthru
      _
    // Predicated region
    $region26: #{tpu_custom_call.1} parent=1 // pred_check
      _
    $region27: #{tpu_custom_call.1} parent=1 // pred_check_branch
      %1669 = sbr.rel (0) target = $region29
    $region28: #{tpu_custom_call.1} parent=1 // pred_region
      %1670 = dma.done [#allocation3], 256
    $region29: #{tpu_custom_call.1} parent=1 // pred_fallthru
      _
    %1671 = vsyncpa [#allocation3], 1

</llo_original>
